<compile_context>
chip_gen: v7x
topology: tpu7x:2x2x1
jax: 0.10.0
libtpu: 0.0.40
codegen_flags: <defaults>
</compile_context>

<pallas_src>
import functools

import jax
import jax.numpy as jnp
from jax.experimental import pallas as pl
from jax.experimental.pallas import tpu as pltpu


# ----------------------------------------------------------------------------
# Fused Bottleneck kernel (one image per grid step, everything VMEM-resident).
# ----------------------------------------------------------------------------
def _bottleneck_kernel(x_ref, w1_ref, b1_ref, w2_ref, b2_ref, w3_ref, b3_ref,
                       *rest, H, W, has_sc):
    if has_sc:
        wsc_ref, bsc_ref, o_ref = rest
    else:
        (o_ref,) = rest

    x = x_ref[0]                                                   # [H*W, Cin] bf16
    planes = w1_ref.shape[1]

    # ---- conv1 (1x1) + bn1 + relu -------------------------------------------
    h1 = jnp.dot(x, w1_ref[...], preferred_element_type=jnp.float32)
    h1 = jnp.maximum(h1 + b1_ref[...], 0.0)
    out1 = h1.astype(jnp.bfloat16).reshape(H, W, planes)           # stays in VMEM

    # ---- conv2 (3x3, circular pad=1) + bn2 + relu ----------------------------
    # circular pad realized in VMEM (no HBM round-trip of a padded activation)
    xp = jnp.concatenate([out1[-1:], out1, out1[:1]], axis=0)      # [H+2, W, C]
    xp = jnp.concatenate([xp[:, -1:], xp, xp[:, :1]], axis=1)      # [H+2, W+2, C]
    # in-VMEM im2col -> a single K = 9*C matmul (fills the MXU K depth)
    taps = [xp[dy:dy + H, dx:dx + W, :] for dy in range(3) for dx in range(3)]
    cols = jnp.concatenate(taps, axis=-1).reshape(H * W, 9 * planes)
    h2 = jnp.dot(cols, w2_ref[...], preferred_element_type=jnp.float32)
    h2 = jnp.maximum(h2 + b2_ref[...], 0.0)
    out2 = h2.astype(jnp.bfloat16)                                 # [H*W, planes]

    # ---- conv3 (1x1) + bn3 ---------------------------------------------------
    y = jnp.dot(out2, w3_ref[...], preferred_element_type=jnp.float32)
    y = y + b3_ref[...]

    # ---- shortcut + residual add + relu (fp32 epilogue) ----------------------
    if has_sc:
        sc = jnp.dot(x, wsc_ref[...], preferred_element_type=jnp.float32)
        sc = sc + bsc_ref[...]
    else:
        # identity shortcut: bf16 residual stream, add kept in fp32
        sc = x.astype(jnp.float32)

    o_ref[0] = jnp.maximum(y + sc, 0.0).astype(o_ref.dtype)


def bottleneck_pallas(params, x_flat, H, W):
    """x_flat: [B, H*W, Cin] bf16 -> [B, H*W, 4*planes] f32 (stride-1 output)."""
    B, HW, Cin = x_flat.shape
    planes = params["w1"].shape[1]
    outp = params["w3"].shape[1]
    has_sc = "w_sc" in params

    inputs = [x_flat, params["w1"], params["b1"], params["w2"], params["b2"],
              params["w3"], params["b3"]]
    in_specs = [
        pl.BlockSpec((1, HW, Cin), lambda b: (b, 0, 0)),
        pl.BlockSpec((Cin, planes), lambda b: (0, 0)),
        pl.BlockSpec((1, planes), lambda b: (0, 0)),
        pl.BlockSpec((9 * planes, planes), lambda b: (0, 0)),
        pl.BlockSpec((1, planes), lambda b: (0, 0)),
        pl.BlockSpec((planes, outp), lambda b: (0, 0)),
        pl.BlockSpec((1, outp), lambda b: (0, 0)),
    ]
    if has_sc:
        inputs += [params["w_sc"], params["b_sc"]]
        in_specs += [pl.BlockSpec((Cin, outp), lambda b: (0, 0)),
                     pl.BlockSpec((1, outp), lambda b: (0, 0))]

    kernel = functools.partial(_bottleneck_kernel, H=H, W=W, has_sc=has_sc)
    return pl.pallas_call(
        kernel,
        out_shape=jax.ShapeDtypeStruct((B, HW, outp), jnp.float32),
        grid_spec=pltpu.PrefetchScalarGridSpec(
            num_scalar_prefetch=0,
            grid=(B,),
            in_specs=in_specs,
            out_specs=pl.BlockSpec((1, HW, outp), lambda b: (b, 0, 0)),
        ),
        compiler_params=pltpu.CompilerParams(
            dimension_semantics=("parallel",),          # batch split across TCs
            vmem_limit_bytes=48 * 1024 * 1024),         # headroom for v7x's 64 MiB
    )(*inputs)


# ----------------------------------------------------------------------------
# Parameters: deterministic synthetic init, eval-mode BN folded into weights.
# ----------------------------------------------------------------------------
def _fold_bn(key, c, eps=1e-5):
    k1, k2, k3, k4 = jax.random.split(key, 4)
    gamma = 1.0 + 0.1 * jax.random.normal(k1, (c,), jnp.float32)
    beta = 0.1 * jax.random.normal(k2, (c,), jnp.float32)
    mean = 0.1 * jax.random.normal(k3, (c,), jnp.float32)
    var = 1.0 + 0.1 * jax.random.uniform(k4, (c,), jnp.float32)
    scale = gamma / jnp.sqrt(var + eps)
    shift = beta - mean * scale
    return scale, shift


def init_bottleneck(key, in_planes, planes, stride=1, expansion=4):
    outp = expansion * planes
    ks = jax.random.split(key, 8)
    p = {}
    # conv1: 1x1 (Cin -> planes), BN1 scale folded into weights, shift kept as bias.
    w1 = 0.05 * jax.random.normal(ks[0], (in_planes, planes), jnp.float32)
    s1, b1 = _fold_bn(ks[1], planes)
    p["w1"] = (w1 * s1[None, :]).astype(jnp.bfloat16)
    p["b1"] = b1.reshape(1, planes)
    # conv2: 3x3 (planes -> planes), HWIO -> im2col layout [9*Cin, Cout], BN2 folded.
    w2 = 0.05 * jax.random.normal(ks[2], (3, 3, planes, planes), jnp.float32)
    s2, b2 = _fold_bn(ks[3], planes)
    p["w2"] = (w2 * s2[None, None, None, :]).reshape(9 * planes, planes).astype(jnp.bfloat16)
    p["b2"] = b2.reshape(1, planes)
    # conv3: 1x1 (planes -> 4*planes), BN3 folded.
    w3 = 0.05 * jax.random.normal(ks[4], (planes, outp), jnp.float32)
    s3, b3 = _fold_bn(ks[5], outp)
    p["w3"] = (w3 * s3[None, :]).astype(jnp.bfloat16)
    p["b3"] = b3.reshape(1, outp)
    # shortcut 1x1 conv + BN when needed (same condition as the PyTorch module).
    if stride != 1 or in_planes != outp:
        wsc = 0.05 * jax.random.normal(ks[6], (in_planes, outp), jnp.float32)
        ssc, bsc = _fold_bn(ks[7], outp)
        p["w_sc"] = (wsc * ssc[None, :]).astype(jnp.bfloat16)
        p["b_sc"] = bsc.reshape(1, outp)
    return p


# ----------------------------------------------------------------------------
# Forward pass (matches Bottleneck.forward semantics, eval-mode BN).
# ----------------------------------------------------------------------------
def bottleneck_forward(params, x_nchw, stride=1):
    B, Cin, H, W = x_nchw.shape
    x_nhwc = jnp.transpose(x_nchw, (0, 2, 3, 1))
    x_flat = x_nhwc.reshape(B, H * W, Cin).astype(jnp.bfloat16)

    out = bottleneck_pallas(params, x_flat, H, W)          # [B, H*W, 4*planes] f32
    out = out.reshape(B, H, W, out.shape[-1])
    if stride != 1:
        # All three convs, the shortcut and the ReLU commute with spatial subsampling,
        # so running at stride 1 and subsampling is exact.
        # TODO(synk): wasteful for stride>1 (4x extra FLOPs at stride=2); a dedicated
        # strided-tap fused kernel would compute only the needed output rows.
        out = out[:, ::stride, ::stride, :]
    return jnp.transpose(out, (0, 3, 1, 2))                # NCHW, like torch


# ----------------------------------------------------------------------------
# Pure-JAX reference (same folded bf16 weights / fp32 accumulate) for a parity check.
# ----------------------------------------------------------------------------
def bottleneck_reference(params, x_nchw, stride=1):
    B, Cin, H, W = x_nchw.shape
    f32 = jnp.float32
    x = jnp.transpose(x_nchw, (0, 2, 3, 1)).astype(jnp.bfloat16)   # [B,H,W,Cin]

    h1 = jnp.einsum("bhwc,cp->bhwp", x, params["w1"], preferred_element_type=f32)
    h1 = jnp.maximum(h1 + params["b1"].reshape(1, 1, 1, -1), 0.0).astype(jnp.bfloat16)

    xp = jnp.concatenate([h1[:, -1:], h1, h1[:, :1]], axis=1)
    xp = jnp.concatenate([xp[:, :, -1:], xp, xp[:, :, :1]], axis=2)
    taps = [xp[:, dy:dy + H, dx:dx + W, :] for dy in range(3) for dx in range(3)]
    cols = jnp.concatenate(taps, axis=-1)                           # [B,H,W,9*planes]
    h2 = jnp.einsum("bhwk,kp->bhwp", cols, params["w2"], preferred_element_type=f32)
    h2 = jnp.maximum(h2 + params["b2"].reshape(1, 1, 1, -1), 0.0).astype(jnp.bfloat16)

    y = jnp.einsum("bhwp,pn->bhwn", h2, params["w3"], preferred_element_type=f32)
    y = y + params["b3"].reshape(1, 1, 1, -1)

    if "w_sc" in params:
        sc = jnp.einsum("bhwc,cn->bhwn", x, params["w_sc"], preferred_element_type=f32)
        sc = sc + params["b_sc"].reshape(1, 1, 1, -1)
    else:
        sc = x.astype(f32)

    out = jnp.maximum(y + sc, 0.0)
    if stride != 1:
        out = out[:, ::stride, ::stride, :]
    return jnp.transpose(out, (0, 3, 1, 2))


if __name__ == "__main__":
    key = jax.random.PRNGKey(0)
    kp, kx = jax.random.split(key)
    in_planes, planes, stride = 64, 64, 1      # 4*planes=256 != in_planes -> conv shortcut
    params = init_bottleneck(kp, in_planes, planes, stride)
    x = jax.random.normal(kx, (2, in_planes, 16, 16), jnp.float32)

    fwd = jax.jit(functools.partial(bottleneck_forward, stride=stride))
    out = jax.block_until_ready(fwd(params, x))
    assert out.shape == (2, 4 * planes, 16, 16), out.shape
    assert bool(jnp.all(jnp.isfinite(out)))

    ref = jax.block_until_ready(
        jax.jit(functools.partial(bottleneck_reference, stride=stride))(params, x))
    max_err = float(jnp.max(jnp.abs(out - ref)))
    assert bool(jnp.allclose(out, ref, rtol=1e-2, atol=1e-2)), max_err

    print("KERNEL_OK")
</pallas_src>

<mosaic_0001>
module attributes {stable_mosaic.version = 11 : i64} {
  func.func @_bottleneck_kernel(%arg0: i32, %arg1: memref<1x256x64xbf16, #tpu.memory_space<vmem>>, %arg2: memref<64x64xbf16, #tpu.memory_space<vmem>>, %arg3: memref<1x64xf32, #tpu.memory_space<vmem>>, %arg4: memref<576x64xbf16, #tpu.memory_space<vmem>>, %arg5: memref<1x64xf32, #tpu.memory_space<vmem>>, %arg6: memref<64x256xbf16, #tpu.memory_space<vmem>>, %arg7: memref<1x256xf32, #tpu.memory_space<vmem>>, %arg8: memref<64x256xbf16, #tpu.memory_space<vmem>>, %arg9: memref<1x256xf32, #tpu.memory_space<vmem>>, %arg10: memref<1x256x256xf32, #tpu.memory_space<vmem>>) attributes {dimension_semantics = [#tpu.dimension_semantics<parallel>], iteration_bounds = array<i64: 2>, scalar_prefetch = 0 : i64, scratch_operands = 0 : i64, tpu.core_type = #tpu.core_type<tc>, window_params = [{transform_indices = @transform_0, window_bounds = array<i64: 1, 256, 64>}, {pipeline_mode = #tpu.pipeline_mode<synchronous>, transform_indices = @transform_1, window_bounds = array<i64: 64, 64>}, {pipeline_mode = #tpu.pipeline_mode<synchronous>, transform_indices = @transform_2, window_bounds = array<i64: 1, 64>}, {pipeline_mode = #tpu.pipeline_mode<synchronous>, transform_indices = @transform_3, window_bounds = array<i64: 576, 64>}, {pipeline_mode = #tpu.pipeline_mode<synchronous>, transform_indices = @transform_4, window_bounds = array<i64: 1, 64>}, {pipeline_mode = #tpu.pipeline_mode<synchronous>, transform_indices = @transform_5, window_bounds = array<i64: 64, 256>}, {pipeline_mode = #tpu.pipeline_mode<synchronous>, transform_indices = @transform_6, window_bounds = array<i64: 1, 256>}, {pipeline_mode = #tpu.pipeline_mode<synchronous>, transform_indices = @transform_7, window_bounds = array<i64: 64, 256>}, {pipeline_mode = #tpu.pipeline_mode<synchronous>, transform_indices = @transform_8, window_bounds = array<i64: 1, 256>}, {transform_indices = @transform_9, window_bounds = array<i64: 1, 256, 256>}]} {
    %c0 = arith.constant 0 : index
    %c0_0 = arith.constant 0 : index
    %c0_1 = arith.constant 0 : index
    %0 = vector.load %arg1[%c0, %c0_0, %c0_1] : memref<1x256x64xbf16, #tpu.memory_space<vmem>>, vector<1x256x64xbf16>
    %1 = vector.shape_cast %0 : vector<1x256x64xbf16> to vector<256x64xbf16>
    %c0_2 = arith.constant 0 : index
    %c0_3 = arith.constant 0 : index
    %2 = vector.load %arg2[%c0_2, %c0_3] : memref<64x64xbf16, #tpu.memory_space<vmem>>, vector<64x64xbf16>
    %cst = arith.constant dense<0.000000e+00> : vector<256x64xf32>
    %3 = tpu.matmul %1, %2, %cst {dimension_numbers = #tpu.dot_dimension_numbers<[1], [0], [0], [1], [0, 0, 1, 1], [], []>} : vector<256x64xbf16>, vector<64x64xbf16>, vector<256x64xf32> -> vector<256x64xf32>
    %c0_4 = arith.constant 0 : index
    %c0_5 = arith.constant 0 : index
    %4 = vector.load %arg3[%c0_4, %c0_5] : memref<1x64xf32, #tpu.memory_space<vmem>>, vector<1x64xf32>
    %5 = vector.broadcast %4 : vector<1x64xf32> to vector<256x64xf32>
    %6 = arith.addf %3, %5 : vector<256x64xf32>
    %cst_6 = arith.constant 0.000000e+00 : f32
    %7 = vector.broadcast %cst_6 : f32 to vector<256x64xf32>
    %8 = arith.maximumf %6, %7 : vector<256x64xf32>
    %9 = arith.truncf %8 : vector<256x64xf32> to vector<256x64xbf16>
    %10 = vector.shape_cast %9 : vector<256x64xbf16> to vector<16x16x64xbf16>
    %11 = vector.extract_strided_slice %10 {offsets = [15, 0, 0], sizes = [1, 16, 64], strides = [1, 1, 1]} : vector<16x16x64xbf16> to vector<1x16x64xbf16>
    %12 = vector.extract_strided_slice %10 {offsets = [0, 0, 0], sizes = [1, 16, 64], strides = [1, 1, 1]} : vector<16x16x64xbf16> to vector<1x16x64xbf16>
    %13 = tpu.concatenate %11, %10, %12 in 0 : vector<1x16x64xbf16>, vector<16x16x64xbf16>, vector<1x16x64xbf16> -> vector<18x16x64xbf16>
    %14 = vector.extract_strided_slice %13 {offsets = [0, 15, 0], sizes = [18, 1, 64], strides = [1, 1, 1]} : vector<18x16x64xbf16> to vector<18x1x64xbf16>
    %15 = vector.extract_strided_slice %13 {offsets = [0, 0, 0], sizes = [18, 1, 64], strides = [1, 1, 1]} : vector<18x16x64xbf16> to vector<18x1x64xbf16>
    %16 = tpu.concatenate %14, %13, %15 in 1 : vector<18x1x64xbf16>, vector<18x16x64xbf16>, vector<18x1x64xbf16> -> vector<18x18x64xbf16>
    %17 = vector.extract_strided_slice %16 {offsets = [0, 0, 0], sizes = [16, 16, 64], strides = [1, 1, 1]} : vector<18x18x64xbf16> to vector<16x16x64xbf16>
    %18 = vector.extract_strided_slice %16 {offsets = [0, 1, 0], sizes = [16, 16, 64], strides = [1, 1, 1]} : vector<18x18x64xbf16> to vector<16x16x64xbf16>
    %19 = vector.extract_strided_slice %16 {offsets = [0, 2, 0], sizes = [16, 16, 64], strides = [1, 1, 1]} : vector<18x18x64xbf16> to vector<16x16x64xbf16>
    %20 = vector.extract_strided_slice %16 {offsets = [1, 0, 0], sizes = [16, 16, 64], strides = [1, 1, 1]} : vector<18x18x64xbf16> to vector<16x16x64xbf16>
    %21 = vector.extract_strided_slice %16 {offsets = [1, 1, 0], sizes = [16, 16, 64], strides = [1, 1, 1]} : vector<18x18x64xbf16> to vector<16x16x64xbf16>
    %22 = vector.extract_strided_slice %16 {offsets = [1, 2, 0], sizes = [16, 16, 64], strides = [1, 1, 1]} : vector<18x18x64xbf16> to vector<16x16x64xbf16>
    %23 = vector.extract_strided_slice %16 {offsets = [2, 0, 0], sizes = [16, 16, 64], strides = [1, 1, 1]} : vector<18x18x64xbf16> to vector<16x16x64xbf16>
    %24 = vector.extract_strided_slice %16 {offsets = [2, 1, 0], sizes = [16, 16, 64], strides = [1, 1, 1]} : vector<18x18x64xbf16> to vector<16x16x64xbf16>
    %25 = vector.extract_strided_slice %16 {offsets = [2, 2, 0], sizes = [16, 16, 64], strides = [1, 1, 1]} : vector<18x18x64xbf16> to vector<16x16x64xbf16>
    %26 = tpu.concatenate %17, %18, %19, %20, %21, %22, %23, %24, %25 in 2 : vector<16x16x64xbf16>, vector<16x16x64xbf16>, vector<16x16x64xbf16>, vector<16x16x64xbf16>, vector<16x16x64xbf16>, vector<16x16x64xbf16>, vector<16x16x64xbf16>, vector<16x16x64xbf16>, vector<16x16x64xbf16> -> vector<16x16x576xbf16>
    %27 = vector.shape_cast %26 : vector<16x16x576xbf16> to vector<256x576xbf16>
    %c0_7 = arith.constant 0 : index
    %c0_8 = arith.constant 0 : index
    %28 = vector.load %arg4[%c0_7, %c0_8] : memref<576x64xbf16, #tpu.memory_space<vmem>>, vector<576x64xbf16>
    %cst_9 = arith.constant dense<0.000000e+00> : vector<256x64xf32>
    %29 = tpu.matmul %27, %28, %cst_9 {dimension_numbers = #tpu.dot_dimension_numbers<[1], [0], [0], [1], [0, 0, 1, 1], [], []>} : vector<256x576xbf16>, vector<576x64xbf16>, vector<256x64xf32> -> vector<256x64xf32>
    %c0_10 = arith.constant 0 : index
    %c0_11 = arith.constant 0 : index
    %30 = vector.load %arg5[%c0_10, %c0_11] : memref<1x64xf32, #tpu.memory_space<vmem>>, vector<1x64xf32>
    %31 = vector.broadcast %30 : vector<1x64xf32> to vector<256x64xf32>
    %32 = arith.addf %29, %31 : vector<256x64xf32>
    %cst_12 = arith.constant 0.000000e+00 : f32
    %33 = vector.broadcast %cst_12 : f32 to vector<256x64xf32>
    %34 = arith.maximumf %32, %33 : vector<256x64xf32>
    %35 = arith.truncf %34 : vector<256x64xf32> to vector<256x64xbf16>
    %c0_13 = arith.constant 0 : index
    %c0_14 = arith.constant 0 : index
    %36 = vector.load %arg6[%c0_13, %c0_14] : memref<64x256xbf16, #tpu.memory_space<vmem>>, vector<64x256xbf16>
    %cst_15 = arith.constant dense<0.000000e+00> : vector<256x256xf32>
    %37 = tpu.matmul %35, %36, %cst_15 {dimension_numbers = #tpu.dot_dimension_numbers<[1], [0], [0], [1], [0, 0, 1, 1], [], []>} : vector<256x64xbf16>, vector<64x256xbf16>, vector<256x256xf32> -> vector<256x256xf32>
    %c0_16 = arith.constant 0 : index
    %c0_17 = arith.constant 0 : index
    %38 = vector.load %arg7[%c0_16, %c0_17] : memref<1x256xf32, #tpu.memory_space<vmem>>, vector<1x256xf32>
    %39 = vector.broadcast %38 : vector<1x256xf32> to vector<256x256xf32>
    %40 = arith.addf %37, %39 : vector<256x256xf32>
    %c0_18 = arith.constant 0 : index
    %c0_19 = arith.constant 0 : index
    %41 = vector.load %arg8[%c0_18, %c0_19] : memref<64x256xbf16, #tpu.memory_space<vmem>>, vector<64x256xbf16>
    %cst_20 = arith.constant dense<0.000000e+00> : vector<256x256xf32>
    %42 = tpu.matmul %1, %41, %cst_20 {dimension_numbers = #tpu.dot_dimension_numbers<[1], [0], [0], [1], [0, 0, 1, 1], [], []>} : vector<256x64xbf16>, vector<64x256xbf16>, vector<256x256xf32> -> vector<256x256xf32>
    %c0_21 = arith.constant 0 : index
    %c0_22 = arith.constant 0 : index
    %43 = vector.load %arg9[%c0_21, %c0_22] : memref<1x256xf32, #tpu.memory_space<vmem>>, vector<1x256xf32>
    %44 = vector.broadcast %43 : vector<1x256xf32> to vector<256x256xf32>
    %45 = arith.addf %42, %44 : vector<256x256xf32>
    %46 = arith.addf %40, %45 : vector<256x256xf32>
    %cst_23 = arith.constant 0.000000e+00 : f32
    %47 = vector.broadcast %cst_23 : f32 to vector<256x256xf32>
    %48 = arith.maximumf %46, %47 : vector<256x256xf32>
    %c0_24 = arith.constant 0 : index
    %c0_25 = arith.constant 0 : index
    %c0_26 = arith.constant 0 : index
    %49 = vector.load %arg10[%c0_24, %c0_25, %c0_26] : memref<1x256x256xf32, #tpu.memory_space<vmem>>, vector<1x256x256xf32>
    %50 = vector.shape_cast %49 : vector<1x256x256xf32> to vector<256x256xf32>
    %51 = vector.shape_cast %48 : vector<256x256xf32> to vector<1x256x256xf32>
    tpu.vector_store %arg10[%c0_24, %c0_25, %c0_26], %51 {strides = array<i32>} : memref<1x256x256xf32, #tpu.memory_space<vmem>>, vector<1x256x256xf32>,
    return
  }
  func.func @transform_0(%arg0: i32) -> (i32, i32, i32) {
    %c0_i32 = arith.constant 0 : i32
    %c0_i32_0 = arith.constant 0 : i32
    %c0_i32_1 = arith.constant 0 : i32
    return %arg0, %c0_i32, %c0_i32_0 : i32, i32, i32
  }
  func.func @transform_1(%arg0: i32) -> (i32, i32) {
    %c0_i32 = arith.constant 0 : i32
    %c0_i32_0 = arith.constant 0 : i32
    %c0_i32_1 = arith.constant 0 : i32
    return %c0_i32, %c0_i32_0 : i32, i32
  }
  func.func @transform_2(%arg0: i32) -> (i32, i32) {
    %c0_i32 = arith.constant 0 : i32
    %c0_i32_0 = arith.constant 0 : i32
    %c0_i32_1 = arith.constant 0 : i32
    return %c0_i32, %c0_i32_0 : i32, i32
  }
  func.func @transform_3(%arg0: i32) -> (i32, i32) {
    %c0_i32 = arith.constant 0 : i32
    %c0_i32_0 = arith.constant 0 : i32
    %c0_i32_1 = arith.constant 0 : i32
    return %c0_i32, %c0_i32_0 : i32, i32
  }
  func.func @transform_4(%arg0: i32) -> (i32, i32) {
    %c0_i32 = arith.constant 0 : i32
    %c0_i32_0 = arith.constant 0 : i32
    %c0_i32_1 = arith.constant 0 : i32
    return %c0_i32, %c0_i32_0 : i32, i32
  }
  func.func @transform_5(%arg0: i32) -> (i32, i32) {
    %c0_i32 = arith.constant 0 : i32
    %c0_i32_0 = arith.constant 0 : i32
    %c0_i32_1 = arith.constant 0 : i32
    return %c0_i32, %c0_i32_0 : i32, i32
  }
  func.func @transform_6(%arg0: i32) -> (i32, i32) {
    %c0_i32 = arith.constant 0 : i32
    %c0_i32_0 = arith.constant 0 : i32
    %c0_i32_1 = arith.constant 0 : i32
    return %c0_i32, %c0_i32_0 : i32, i32
  }
  func.func @transform_7(%arg0: i32) -> (i32, i32) {
    %c0_i32 = arith.constant 0 : i32
    %c0_i32_0 = arith.constant 0 : i32
    %c0_i32_1 = arith.constant 0 : i32
    return %c0_i32, %c0_i32_0 : i32, i32
  }
  func.func @transform_8(%arg0: i32) -> (i32, i32) {
    %c0_i32 = arith.constant 0 : i32
    %c0_i32_0 = arith.constant 0 : i32
    %c0_i32_1 = arith.constant 0 : i32
    return %c0_i32, %c0_i32_0 : i32, i32
  }
  func.func @transform_9(%arg0: i32) -> (i32, i32, i32) {
    %c0_i32 = arith.constant 0 : i32
    %c0_i32_0 = arith.constant 0 : i32
    %c0_i32_1 = arith.constant 0 : i32
    return %arg0, %c0_i32, %c0_i32_0 : i32, i32, i32
  }
}

</mosaic_0001>

<llo_original>
// kernel: bottleneck_forward.1
$region0: #{bottleneck_forward.1}
  #allocation0 [shape = 'u32[]', space=smem, size = 0x4, offset = 0x4, fixed_abs, tag = 'smem constant byte address 0x4 - core index']
  #allocation1 [shape = 'u32[144,128]{1,0:T(1,128)}', space=vmem, size = 0x12000, scoped, tag = 'internal scratch']
  %s0 = inlined_call_operand.vmem [shape: bf16[2,256,64], index: 0, kind: input, shape index: {}]
  %s1 = inlined_call_operand.vmem [shape: bf16[64,64], index: 1, kind: input, shape index: {}]
  %s2 = inlined_call_operand.vmem [shape: f32[1,64], index: 2, kind: input, shape index: {}]
  %s3 = inlined_call_operand.vmem [shape: bf16[576,64], index: 3, kind: input, shape index: {}]
  %s4 = inlined_call_operand.vmem [shape: f32[1,64], index: 4, kind: input, shape index: {}]
  %s5 = inlined_call_operand.vmem [shape: bf16[64,256], index: 5, kind: input, shape index: {}]
  %s6 = inlined_call_operand.vmem [shape: f32[1,256], index: 6, kind: input, shape index: {}]
  %s7 = inlined_call_operand.vmem [shape: bf16[64,256], index: 7, kind: input, shape index: {}]
  %s8 = inlined_call_operand.vmem [shape: f32[1,256], index: 8, kind: input, shape index: {}]
  %s9 = inlined_call_operand.hbm [shape: f32[2,256,256], index: 9, kind: output, shape index: {}]
  %s10 = sld [smem:[#allocation0]]
  $region69: #{bottleneck_forward.1} parent=0
    _
  %s12 = ssub.s32 1, %s10
  %s13 = scalar_select 0, %s12, %s10
  $region1: #{bottleneck_forward.1} parent=0
    #allocation2 [shape = 'u8[524288]{0}', space=vmem, size = 0x80000, scoped, tag = 'output window, operand 0']
    #allocation3 [shape = 's32[2]{0}', space=sflag, size = 0x8, scoped, tag = 'scoped memory for bottleneck_forward.1']
    %14 = vsyncpa [#allocation3], 0
    %s15 = scalar_lea.sflag [#allocation3], 1
    %16 = vsyncpa %s15, 0
    loop: start=0, step=1, limit=4
    $region2: #{bottleneck_forward.1} parent=1 // loop_pre_header
      _
    $region3: #{bottleneck_forward.1} parent=1 // loop_header
      %s18 = sphi 0, %s22
      %p19 = scmp.ge.s32.totalorder %s18, 4
      %s28 = sphi 0, %s30
      %s31 = sphi 0, %s28
      %s32 = sphi 0, %s31
      %s48 = sphi 0, %s32
      %s52 = sphi 0, %s52
      %s54 = sphi 0, %s52
      %s55 = sphi 0, %s54
      %s69 = sphi 0, %s55
      %s73 = sphi 0, %s73
      %s75 = sphi 0, %s73
      %s76 = sphi 0, %s75
      %s90 = sphi 0, %s76
      %s94 = sphi 0, %s94
      %s96 = sphi 0, %s94
      %s97 = sphi 0, %s96
      %s111 = sphi 0, %s97
      %s115 = sphi 0, %s115
      %s117 = sphi 0, %s115
      %s118 = sphi 0, %s117
      %s132 = sphi 0, %s118
      %s136 = sphi 0, %s136
      %s138 = sphi 0, %s136
      %s139 = sphi 0, %s138
      %s153 = sphi 0, %s139
      %s157 = sphi 0, %s157
      %s159 = sphi 0, %s157
      %s160 = sphi 0, %s159
      %s174 = sphi 0, %s160
      %s178 = sphi 0, %s178
      %s180 = sphi 0, %s178
      %s181 = sphi 0, %s180
      %s195 = sphi 0, %s181
      %s199 = sphi 0, %s199
      %s201 = sphi 0, %s199
      %s202 = sphi 0, %s201
      %s216 = sphi 0, %s202
      %s222 = sphi 0, %s224
      %s225 = sphi 0, %s222
      %s226 = sphi 0, %s225
      %s242 = sphi 0, %s226
    $region4: #{bottleneck_forward.1} parent=1 // loop_header_branch
      %21 = sbr.rel (%p19) target = $region8
    $region5: #{bottleneck_forward.1} parent=1 // loop_body
      %s23 = ssub.s32 %s18, 1
      %s24 = ssub.s32 %s18, 2
      %s25 = sadd.s32 %s18, 1
      %s26 = ssub.s32 %s18, %s25
      %p27 = scmp.eq.s32.totalorder %s26, 0
      %s29 = sadd.s32 %s28, 1
      %s30 = scalar_select %p27, %s28, %s29
      %p33 = pneg %p27
      %p34 = scmp.eq.s32.totalorder %s18, 1
      %p35 = por %p33, %p34
      %p36 = scmp.ne.s32.totalorder %s28, %s31
      %p37 = scmp.eq.s32.totalorder %s18, 0
      %p38 = por %p36, %p37
      %p39 = scmp.ne.s32.totalorder %s28, %s31
      %p40 = scmp.eq.s32.totalorder %s23, 1
      %p41 = por %p39, %p40
      %p42 = scmp.ne.s32.totalorder %s31, %s32
      %p43 = scmp.eq.s32.totalorder %s23, 0
      %p44 = por %p42, %p43
      %p45 = scmp.ne.s32.totalorder %s31, %s32
      %p46 = scmp.eq.s32.totalorder %s24, 1
      %p47 = por %p45, %p46
      %p49 = scmp.ne.s32.totalorder %s32, %s48
      %p50 = scmp.eq.s32.totalorder %s24, 0
      %p51 = por %p49, %p50
      %s53 = sadd.s32 %s52, 1
      %p56 = scmp.eq.s32.totalorder %s18, 1
      %p57 = scmp.ne.s32.totalorder %s52, %s54
      %p58 = scmp.eq.s32.totalorder %s18, 0
      %p59 = por %p57, %p58
      %p60 = scmp.ne.s32.totalorder %s52, %s54
      %p61 = scmp.eq.s32.totalorder %s23, 1
      %p62 = por %p60, %p61
      %p63 = scmp.ne.s32.totalorder %s54, %s55
      %p64 = scmp.eq.s32.totalorder %s23, 0
      %p65 = por %p63, %p64
      %p66 = scmp.ne.s32.totalorder %s54, %s55
      %p67 = scmp.eq.s32.totalorder %s24, 1
      %p68 = por %p66, %p67
      %p70 = scmp.ne.s32.totalorder %s55, %s69
      %p71 = scmp.eq.s32.totalorder %s24, 0
      %p72 = por %p70, %p71
      %s74 = sadd.s32 %s73, 1
      %p77 = scmp.eq.s32.totalorder %s18, 1
      %p78 = scmp.ne.s32.totalorder %s73, %s75
      %p79 = scmp.eq.s32.totalorder %s18, 0
      %p80 = por %p78, %p79
      %p81 = scmp.ne.s32.totalorder %s73, %s75
      %p82 = scmp.eq.s32.totalorder %s23, 1
      %p83 = por %p81, %p82
      %p84 = scmp.ne.s32.totalorder %s75, %s76
      %p85 = scmp.eq.s32.totalorder %s23, 0
      %p86 = por %p84, %p85
      %p87 = scmp.ne.s32.totalorder %s75, %s76
      %p88 = scmp.eq.s32.totalorder %s24, 1
      %p89 = por %p87, %p88
      %p91 = scmp.ne.s32.totalorder %s76, %s90
      %p92 = scmp.eq.s32.totalorder %s24, 0
      %p93 = por %p91, %p92
      %s95 = sadd.s32 %s94, 1
      %p98 = scmp.eq.s32.totalorder %s18, 1
      %p99 = scmp.ne.s32.totalorder %s94, %s96
      %p100 = scmp.eq.s32.totalorder %s18, 0
      %p101 = por %p99, %p100
      %p102 = scmp.ne.s32.totalorder %s94, %s96
      %p103 = scmp.eq.s32.totalorder %s23, 1
      %p104 = por %p102, %p103
      %p105 = scmp.ne.s32.totalorder %s96, %s97
      %p106 = scmp.eq.s32.totalorder %s23, 0
      %p107 = por %p105, %p106
      %p108 = scmp.ne.s32.totalorder %s96, %s97
      %p109 = scmp.eq.s32.totalorder %s24, 1
      %p110 = por %p108, %p109
      %p112 = scmp.ne.s32.totalorder %s97, %s111
      %p113 = scmp.eq.s32.totalorder %s24, 0
      %p114 = por %p112, %p113
      %s116 = sadd.s32 %s115, 1
      %p119 = scmp.eq.s32.totalorder %s18, 1
      %p120 = scmp.ne.s32.totalorder %s115, %s117
      %p121 = scmp.eq.s32.totalorder %s18, 0
      %p122 = por %p120, %p121
      %p123 = scmp.ne.s32.totalorder %s115, %s117
      %p124 = scmp.eq.s32.totalorder %s23, 1
      %p125 = por %p123, %p124
      %p126 = scmp.ne.s32.totalorder %s117, %s118
      %p127 = scmp.eq.s32.totalorder %s23, 0
      %p128 = por %p126, %p127
      %p129 = scmp.ne.s32.totalorder %s117, %s118
      %p130 = scmp.eq.s32.totalorder %s24, 1
      %p131 = por %p129, %p130
      %p133 = scmp.ne.s32.totalorder %s118, %s132
      %p134 = scmp.eq.s32.totalorder %s24, 0
      %p135 = por %p133, %p134
      %s137 = sadd.s32 %s136, 1
      %p140 = scmp.eq.s32.totalorder %s18, 1
      %p141 = scmp.ne.s32.totalorder %s136, %s138
      %p142 = scmp.eq.s32.totalorder %s18, 0
      %p143 = por %p141, %p142
      %p144 = scmp.ne.s32.totalorder %s136, %s138
      %p145 = scmp.eq.s32.totalorder %s23, 1
      %p146 = por %p144, %p145
      %p147 = scmp.ne.s32.totalorder %s138, %s139
      %p148 = scmp.eq.s32.totalorder %s23, 0
      %p149 = por %p147, %p148
      %p150 = scmp.ne.s32.totalorder %s138, %s139
      %p151 = scmp.eq.s32.totalorder %s24, 1
      %p152 = por %p150, %p151
      %p154 = scmp.ne.s32.totalorder %s139, %s153
      %p155 = scmp.eq.s32.totalorder %s24, 0
      %p156 = por %p154, %p155
      %s158 = sadd.s32 %s157, 1
      %p161 = scmp.eq.s32.totalorder %s18, 1
      %p162 = scmp.ne.s32.totalorder %s157, %s159
      %p163 = scmp.eq.s32.totalorder %s18, 0
      %p164 = por %p162, %p163
      %p165 = scmp.ne.s32.totalorder %s157, %s159
      %p166 = scmp.eq.s32.totalorder %s23, 1
      %p167 = por %p165, %p166
      %p168 = scmp.ne.s32.totalorder %s159, %s160
      %p169 = scmp.eq.s32.totalorder %s23, 0
      %p170 = por %p168, %p169
      %p171 = scmp.ne.s32.totalorder %s159, %s160
      %p172 = scmp.eq.s32.totalorder %s24, 1
      %p173 = por %p171, %p172
      %p175 = scmp.ne.s32.totalorder %s160, %s174
      %p176 = scmp.eq.s32.totalorder %s24, 0
      %p177 = por %p175, %p176
      %s179 = sadd.s32 %s178, 1
      %p182 = scmp.eq.s32.totalorder %s18, 1
      %p183 = scmp.ne.s32.totalorder %s178, %s180
      %p184 = scmp.eq.s32.totalorder %s18, 0
      %p185 = por %p183, %p184
      %p186 = scmp.ne.s32.totalorder %s178, %s180
      %p187 = scmp.eq.s32.totalorder %s23, 1
      %p188 = por %p186, %p187
      %p189 = scmp.ne.s32.totalorder %s180, %s181
      %p190 = scmp.eq.s32.totalorder %s23, 0
      %p191 = por %p189, %p190
      %p192 = scmp.ne.s32.totalorder %s180, %s181
      %p193 = scmp.eq.s32.totalorder %s24, 1
      %p194 = por %p192, %p193
      %p196 = scmp.ne.s32.totalorder %s181, %s195
      %p197 = scmp.eq.s32.totalorder %s24, 0
      %p198 = por %p196, %p197
      %s200 = sadd.s32 %s199, 1
      %p203 = scmp.eq.s32.totalorder %s18, 1
      %p204 = scmp.ne.s32.totalorder %s199, %s201
      %p205 = scmp.eq.s32.totalorder %s18, 0
      %p206 = por %p204, %p205
      %p207 = scmp.ne.s32.totalorder %s199, %s201
      %p208 = scmp.eq.s32.totalorder %s23, 1
      %p209 = por %p207, %p208
      %p210 = scmp.ne.s32.totalorder %s201, %s202
      %p211 = scmp.eq.s32.totalorder %s23, 0
      %p212 = por %p210, %p211
      %p213 = scmp.ne.s32.totalorder %s201, %s202
      %p214 = scmp.eq.s32.totalorder %s24, 1
      %p215 = por %p213, %p214
      %p217 = scmp.ne.s32.totalorder %s202, %s216
      %p218 = scmp.eq.s32.totalorder %s24, 0
      %p219 = por %p217, %p218
      %s220 = ssub.s32 %s18, %s25
      %p221 = scmp.eq.s32.totalorder %s220, 0
      %s223 = sadd.s32 %s222, 1
      %s224 = scalar_select %p221, %s222, %s223
      %p227 = pneg %p221
      %p228 = scmp.eq.s32.totalorder %s18, 1
      %p229 = por %p227, %p228
      %p230 = scmp.ne.s32.totalorder %s222, %s225
      %p231 = scmp.eq.s32.totalorder %s18, 0
      %p232 = por %p230, %p231
      %p233 = scmp.ne.s32.totalorder %s222, %s225
      %p234 = scmp.eq.s32.totalorder %s23, 1
      %p235 = por %p233, %p234
      %p236 = scmp.ne.s32.totalorder %s225, %s226
      %p237 = scmp.eq.s32.totalorder %s23, 0
      %p238 = por %p236, %p237
      %p239 = scmp.ne.s32.totalorder %s225, %s226
      %p240 = scmp.eq.s32.totalorder %s24, 1
      %p241 = por %p239, %p240
      %p243 = scmp.ne.s32.totalorder %s226, %s242
      %p244 = scmp.eq.s32.totalorder %s24, 0
      %p245 = por %p243, %p244
      %p246 = scmp.le.s32.totalorder 1, %s18
      %p247 = scmp.lt.s32.totalorder %s18, 3
      %p248 = pnand %p246, %p247
      %p249 = pneg %p248
      // Predicated region
      $region9: #{bottleneck_forward.1} parent=5 // pred_check
        _
      $region10: #{bottleneck_forward.1} parent=5 // pred_check_branch
        %251 = sbr.rel (%p248) target = $region12
      $region11: #{bottleneck_forward.1} parent=5 // pred_region
        %s252 = ssub.s32 %s18, 1
        // Predicated region
        $region13: #{bottleneck_forward.1} parent=11 // pred_check
          %p253 = pneg %p65
        $region14: #{bottleneck_forward.1} parent=11 // pred_check_branch
          %255 = sbr.rel (%p253) target = $region16
        $region15: #{bottleneck_forward.1} parent=11 // pred_region
          _
        $region16: #{bottleneck_forward.1} parent=11 // pred_fallthru
          _
        // Predicated region
        $region17: #{bottleneck_forward.1} parent=11 // pred_check
          %p256 = pneg %p86
        $region18: #{bottleneck_forward.1} parent=11 // pred_check_branch
          %258 = sbr.rel (%p256) target = $region20
        $region19: #{bottleneck_forward.1} parent=11 // pred_region
          _
        $region20: #{bottleneck_forward.1} parent=11 // pred_fallthru
          _
        // Predicated region
        $region21: #{bottleneck_forward.1} parent=11 // pred_check
          %p259 = pneg %p107
        $region22: #{bottleneck_forward.1} parent=11 // pred_check_branch
          %261 = sbr.rel (%p259) target = $region24
        $region23: #{bottleneck_forward.1} parent=11 // pred_region
          _
        $region24: #{bottleneck_forward.1} parent=11 // pred_fallthru
          _
        // Predicated region
        $region25: #{bottleneck_forward.1} parent=11 // pred_check
          %p262 = pneg %p128
        $region26: #{bottleneck_forward.1} parent=11 // pred_check_branch
          %264 = sbr.rel (%p262) target = $region28
        $region27: #{bottleneck_forward.1} parent=11 // pred_region
          _
        $region28: #{bottleneck_forward.1} parent=11 // pred_fallthru
          _
        // Predicated region
        $region29: #{bottleneck_forward.1} parent=11 // pred_check
          %p265 = pneg %p149
        $region30: #{bottleneck_forward.1} parent=11 // pred_check_branch
          %267 = sbr.rel (%p265) target = $region32
        $region31: #{bottleneck_forward.1} parent=11 // pred_region
          _
        $region32: #{bottleneck_forward.1} parent=11 // pred_fallthru
          _
        // Predicated region
        $region33: #{bottleneck_forward.1} parent=11 // pred_check
          %p268 = pneg %p170
        $region34: #{bottleneck_forward.1} parent=11 // pred_check_branch
          %270 = sbr.rel (%p268) target = $region36
        $region35: #{bottleneck_forward.1} parent=11 // pred_region
          _
        $region36: #{bottleneck_forward.1} parent=11 // pred_fallthru
          _
        // Predicated region
        $region37: #{bottleneck_forward.1} parent=11 // pred_check
          %p271 = pneg %p191
        $region38: #{bottleneck_forward.1} parent=11 // pred_check_branch
          %273 = sbr.rel (%p271) target = $region40
        $region39: #{bottleneck_forward.1} parent=11 // pred_region
          _
        $region40: #{bottleneck_forward.1} parent=11 // pred_fallthru
          _
        // Predicated region
        $region41: #{bottleneck_forward.1} parent=11 // pred_check
          %p274 = pneg %p212
        $region42: #{bottleneck_forward.1} parent=11 // pred_check_branch
          %276 = sbr.rel (%p274) target = $region44
        $region43: #{bottleneck_forward.1} parent=11 // pred_region
          _
        $region44: #{bottleneck_forward.1} parent=11 // pred_fallthru
          _
      $region12: #{bottleneck_forward.1} parent=5 // pred_fallthru
        _
      %p277 = scmp.lt.s32.totalorder %s18, 2
      // Predicated region
      $region45: #{bottleneck_forward.1} parent=5 // pred_check
        %p278 = pneg %p277
      $region46: #{bottleneck_forward.1} parent=5 // pred_check_branch
        %280 = sbr.rel (%p278) target = $region48
      $region47: #{bottleneck_forward.1} parent=5 // pred_region
        // Predicated region
        $region49: #{bottleneck_forward.1} parent=47 // pred_check
          %p281 = pneg %p38
        $region50: #{bottleneck_forward.1} parent=47 // pred_check_branch
          %283 = sbr.rel (%p281) target = $region52
        $region51: #{bottleneck_forward.1} parent=47 // pred_region
          %p284 = scmp.lt.s32.totalorder %s18, 1
          %s285 = scalar_select %p284, %s18, 1
          %s286 = smul.addr %s285, 32
          %s287 = smul.addr %s286, 4
          %s288 = scalar_lea.vmem %s0, %s287
        $region52: #{bottleneck_forward.1} parent=47 // pred_fallthru
          _
      $region48: #{bottleneck_forward.1} parent=5 // pred_fallthru
        _
      %p289 = scmp.le.s32.totalorder 1, %s18
      %p290 = scmp.lt.s32.totalorder %s18, 3
      %p291 = pnand %p289, %p290
      %p292 = pneg %p291
      // Predicated region
      $region53: #{bottleneck_forward.1} parent=5 // pred_check
        _
      $region54: #{bottleneck_forward.1} parent=5 // pred_check_branch
        %294 = sbr.rel (%p291) target = $region56
      $region55: #{bottleneck_forward.1} parent=5 // pred_region
        %s295 = ssub.s32 %s18, 1
        %p296 = scmp.lt.s32.totalorder %s23, 1
        %s297 = scalar_select %p296, %s23, 1
        %s298 = smul.addr %s297, 32
        %s299 = smul.addr %s298, 4
        %s300 = scalar_lea.vmem %s0, %s299
        %p301 = pneg %p44
        %p302 = pneg %p41
        %p303 = pneg %p65
        %p304 = pneg %p62
        %p305 = pneg %p86
        %p306 = pneg %p83
        %p307 = pneg %p107
        %p308 = pneg %p104
        %p309 = pneg %p128
        %p310 = pneg %p125
        %p311 = pneg %p149
        %p312 = pneg %p146
        %p313 = pneg %p170
        %p314 = pneg %p167
        %p315 = pneg %p191
        %p316 = pneg %p188
        %p317 = pneg %p212
        %p318 = pneg %p209
        %p319 = pneg %p238
        %p320 = pneg %p235
        %s321 = sand.u32 %s225, 1
        %s322 = scalar_lea.sflag [#allocation3], %s321
        %s323 = sand.u32 %s225, 1
        %s324 = smul.addr %s323, 512
        %s325 = scalar_lea.vmem [#allocation2], %s324
        %p326 = scmp.lt.s32.totalorder %s23, 1
        %s327 = scalar_select %p326, %s23, 1
        %s328 = smul.addr %s327, 32
        %s329 = smul.addr %s328, 4
        %s330 = scalar_lea.vmem %s0, %s329
        %v332 = vld [vmem:[%s330] sm:$0xf]
        %v333 = vld [vmem:[%s330 + $0x4] sm:$0xf]
        %v334 = vld [vmem:[%s330 + $0x8] sm:$0xf]
        %v335 = vld [vmem:[%s330 + $0xc] sm:$0xf]
        %v336 = vld [vmem:[%s330 + $0x10] sm:$0xf]
        %v337 = vld [vmem:[%s330 + $0x14] sm:$0xf]
        %v338 = vld [vmem:[%s330 + $0x18] sm:$0xf]
        %v339 = vld [vmem:[%s330 + $0x1c] sm:$0xf]
        %v340 = vld [vmem:[%s330 + $0x20] sm:$0xf]
        %v341 = vld [vmem:[%s330 + $0x24] sm:$0xf]
        %v342 = vld [vmem:[%s330 + $0x28] sm:$0xf]
        %v343 = vld [vmem:[%s330 + $0x2c] sm:$0xf]
        %v344 = vld [vmem:[%s330 + $0x30] sm:$0xf]
        %v345 = vld [vmem:[%s330 + $0x34] sm:$0xf]
        %v346 = vld [vmem:[%s330 + $0x38] sm:$0xf]
        %v347 = vld [vmem:[%s330 + $0x3c] sm:$0xf]
        %v348 = vld [vmem:[%s330 + $0x40] sm:$0xf]
        %v349 = vld [vmem:[%s330 + $0x44] sm:$0xf]
        %v350 = vld [vmem:[%s330 + $0x48] sm:$0xf]
        %v351 = vld [vmem:[%s330 + $0x4c] sm:$0xf]
        %v352 = vld [vmem:[%s330 + $0x50] sm:$0xf]
        %v353 = vld [vmem:[%s330 + $0x54] sm:$0xf]
        %v354 = vld [vmem:[%s330 + $0x58] sm:$0xf]
        %v355 = vld [vmem:[%s330 + $0x5c] sm:$0xf]
        %v356 = vld [vmem:[%s330 + $0x60] sm:$0xf]
        %v357 = vld [vmem:[%s330 + $0x64] sm:$0xf]
        %v358 = vld [vmem:[%s330 + $0x68] sm:$0xf]
        %v359 = vld [vmem:[%s330 + $0x6c] sm:$0xf]
        %v360 = vld [vmem:[%s330 + $0x70] sm:$0xf]
        %v361 = vld [vmem:[%s330 + $0x74] sm:$0xf]
        %v362 = vld [vmem:[%s330 + $0x78] sm:$0xf]
        %v363 = vld [vmem:[%s330 + $0x7c] sm:$0xf]
        %v364 = vld [vmem:[%s1] sm:$0xf]
        %v365 = vld [vmem:[%s1 + $0x4] sm:$0xf]
        %v366 = vld [vmem:[%s1 + $0x8] sm:$0xf]
        %v367 = vld [vmem:[%s1 + $0xc] sm:$0xf]
        %v368 = vld [vmem:[%s1 + $0x10] sm:$0xf]
        %v369 = vld [vmem:[%s1 + $0x14] sm:$0xf]
        %v370 = vld [vmem:[%s1 + $0x18] sm:$0xf]
        %v371 = vld [vmem:[%s1 + $0x1c] sm:$0xf]
        %v372 = vld [vmem:[%s2] sm:$0x1]
        %v374 = vlaneseq
        %v375 = vshrl.u32 %v374, 7
        %v376 = vsub.s32 0, %v375
        %v377 = vrot.slane %v372, %v376
        %v411 = vunpack.c.l.b16 %v332
        %v412 = vunpack.c.l.b16 %v333
        %v413 = vunpack.c.l.b16 %v334
        %v414 = vunpack.c.l.b16 %v335
        %v415 = vunpack.c.l.b16 %v336
        %v416 = vunpack.c.l.b16 %v337
        %v417 = vunpack.c.l.b16 %v338
        %v418 = vunpack.c.l.b16 %v339
        %v419 = vunpack.c.l.b16 %v340
        %v420 = vunpack.c.l.b16 %v341
        %v421 = vunpack.c.l.b16 %v342
        %v422 = vunpack.c.l.b16 %v343
        %v423 = vunpack.c.l.b16 %v344
        %v424 = vunpack.c.l.b16 %v345
        %v425 = vunpack.c.l.b16 %v346
        %v426 = vunpack.c.l.b16 %v347
        %v427 = vunpack.c.l.b16 %v348
        %v428 = vunpack.c.l.b16 %v349
        %v429 = vunpack.c.l.b16 %v350
        %v430 = vunpack.c.l.b16 %v351
        %v431 = vunpack.c.l.b16 %v352
        %v432 = vunpack.c.l.b16 %v353
        %v433 = vunpack.c.l.b16 %v354
        %v434 = vunpack.c.l.b16 %v355
        %v435 = vunpack.c.l.b16 %v356
        %v436 = vunpack.c.l.b16 %v357
        %v437 = vunpack.c.l.b16 %v358
        %v438 = vunpack.c.l.b16 %v359
        %v439 = vunpack.c.l.b16 %v360
        %v440 = vunpack.c.l.b16 %v361
        %v441 = vunpack.c.l.b16 %v362
        %v442 = vunpack.c.l.b16 %v363
        %v443 = vpack.c.b16 %v412, %v411
        %v444 = vpack.c.b16 %v414, %v413
        %v445 = vpack.c.b16 %v416, %v415
        %v446 = vpack.c.b16 %v418, %v417
        %v447 = vpack.c.b16 %v420, %v419
        %v448 = vpack.c.b16 %v422, %v421
        %v449 = vpack.c.b16 %v424, %v423
        %v450 = vpack.c.b16 %v426, %v425
        %v451 = vpack.c.b16 %v428, %v427
        %v452 = vpack.c.b16 %v430, %v429
        %v453 = vpack.c.b16 %v432, %v431
        %v454 = vpack.c.b16 %v434, %v433
        %v455 = vpack.c.b16 %v436, %v435
        %v456 = vpack.c.b16 %v438, %v437
        %v457 = vpack.c.b16 %v440, %v439
        %v458 = vpack.c.b16 %v442, %v441
        %v467 = vunpack.c.l.b16 %v364
        %v468 = vunpack.c.l.b16 %v365
        %v469 = vunpack.c.l.b16 %v366
        %v470 = vunpack.c.l.b16 %v367
        %v471 = vunpack.c.l.b16 %v368
        %v472 = vunpack.c.l.b16 %v369
        %v473 = vunpack.c.l.b16 %v370
        %v474 = vunpack.c.l.b16 %v371
        %v475 = vpack.c.b16 %v468, %v467
        %v476 = vpack.c.b16 %v470, %v469
        %v477 = vpack.c.b16 %v472, %v471
        %v478 = vpack.c.b16 %v474, %v473
        %vm483 = vcmask 523264
        %v485 = vsel %vm483, %v443, 0
        %v488 = vsel %vm483, %v444, 0
        %v491 = vsel %vm483, %v445, 0
        %v494 = vsel %vm483, %v446, 0
        %v497 = vsel %vm483, %v447, 0
        %v500 = vsel %vm483, %v448, 0
        %v503 = vsel %vm483, %v449, 0
        %v506 = vsel %vm483, %v450, 0
        %v509 = vsel %vm483, %v451, 0
        %v512 = vsel %vm483, %v452, 0
        %v515 = vsel %vm483, %v453, 0
        %v518 = vsel %vm483, %v454, 0
        %v521 = vsel %vm483, %v455, 0
        %v524 = vsel %vm483, %v456, 0
        %v527 = vsel %vm483, %v457, 0
        %v530 = vsel %vm483, %v458, 0
        %532 = vmatprep.subr.bf16.mxu0 0
        %533 = vmatpush1.bf16.msra.mxu0 %v475
        %534 = vmatprep.subr.bf16.mxu0 0
        %535 = vmatpush1.bf16.msra.mxu0 %v476
        %536 = vmatprep.subr.bf16.mxu0 0
        %537 = vmatpush1.bf16.msra.mxu0 %v477
        %538 = vmatprep.subr.bf16.mxu0 0
        %539 = vmatpush1.bf16.msra.mxu0 %v478
        %540 = vmatprep.subr.bf16.mxu0 0
        %541 = vmatpush1.bf16.msra.mxu0 0
        %542 = vmatprep.subr.bf16.mxu0 0
        %543 = vmatpush1.bf16.msra.mxu0 0
        %544 = vmatprep.subr.bf16.mxu0 0
        %545 = vmatpush1.bf16.msra.mxu0 0
        %546 = vmatprep.subr.bf16.mxu0 0
        %547 = vmatpush1.bf16.msra.mxu0 0
        %548 = vmatprep.subr.bf16.mxu0 0
        %549 = vmatpush1.bf16.msra.mxu0 0
        %550 = vmatprep.subr.bf16.mxu0 0
        %551 = vmatpush1.bf16.msra.mxu0 0
        %552 = vmatprep.subr.bf16.mxu0 0
        %553 = vmatpush1.bf16.msra.mxu0 0
        %554 = vmatprep.subr.bf16.mxu0 0
        %555 = vmatpush1.bf16.msra.mxu0 0
        %556 = vmatprep.subr.bf16.mxu0 0
        %557 = vmatpush1.bf16.msra.mxu0 0
        %558 = vmatprep.subr.bf16.mxu0 0
        %559 = vmatpush1.bf16.msra.mxu0 0
        %560 = vmatprep.subr.bf16.mxu0 0
        %561 = vmatpush1.bf16.msra.mxu0 0
        %562 = vmatprep.subr.bf16.mxu0 0
        %563 = vmatpush1.bf16.msra.mxu0 0
        %564 = vmatprep.mubr.bf16.mxu0 0
        %565 = vmatmul.mubr.bf16.gmra.mrb[0].mxu0 %v485
        %v566 = vpop.f32.mrb[0].mxu0
        %v567 = vadd.f32 %v377, %v566
        %v568 = vpop.f32.mrb[0].mxu0
        %v569 = vpop.f32.mrb[0].mxu0
        %v570 = vadd.f32 %v377, %v569
        %v571 = vpop.f32.mrb[0].mxu0
        %572 = vmatprep.mubr.bf16.mxu0 0
        %573 = vmatmul.mubr.bf16.gmra.mrb[0].mxu0 %v488
        %v574 = vpop.f32.mrb[0].mxu0
        %v575 = vadd.f32 %v377, %v574
        %v576 = vpop.f32.mrb[0].mxu0
        %v577 = vpop.f32.mrb[0].mxu0
        %v578 = vadd.f32 %v377, %v577
        %v579 = vpop.f32.mrb[0].mxu0
        %580 = vmatprep.mubr.bf16.mxu0 0
        %581 = vmatmul.mubr.bf16.gmra.mrb[0].mxu0 %v491
        %v582 = vpop.f32.mrb[0].mxu0
        %v583 = vadd.f32 %v377, %v582
        %v584 = vpop.f32.mrb[0].mxu0
        %v585 = vpop.f32.mrb[0].mxu0
        %v586 = vadd.f32 %v377, %v585
        %v587 = vpop.f32.mrb[0].mxu0
        %588 = vmatprep.mubr.bf16.mxu0 0
        %589 = vmatmul.mubr.bf16.gmra.mrb[0].mxu0 %v494
        %v590 = vpop.f32.mrb[0].mxu0
        %v591 = vadd.f32 %v377, %v590
        %v592 = vpop.f32.mrb[0].mxu0
        %v593 = vpop.f32.mrb[0].mxu0
        %v594 = vadd.f32 %v377, %v593
        %v595 = vpop.f32.mrb[0].mxu0
        %596 = vmatprep.mubr.bf16.mxu0 0
        %597 = vmatmul.mubr.bf16.gmra.mrb[0].mxu0 %v497
        %v598 = vpop.f32.mrb[0].mxu0
        %v599 = vadd.f32 %v377, %v598
        %v600 = vpop.f32.mrb[0].mxu0
        %v601 = vpop.f32.mrb[0].mxu0
        %v602 = vadd.f32 %v377, %v601
        %v603 = vpop.f32.mrb[0].mxu0
        %604 = vmatprep.mubr.bf16.mxu0 0
        %605 = vmatmul.mubr.bf16.gmra.mrb[0].mxu0 %v500
        %v606 = vpop.f32.mrb[0].mxu0
        %v607 = vadd.f32 %v377, %v606
        %v608 = vpop.f32.mrb[0].mxu0
        %v609 = vpop.f32.mrb[0].mxu0
        %v610 = vadd.f32 %v377, %v609
        %v611 = vpop.f32.mrb[0].mxu0
        %612 = vmatprep.mubr.bf16.mxu0 0
        %613 = vmatmul.mubr.bf16.gmra.mrb[0].mxu0 %v503
        %v614 = vpop.f32.mrb[0].mxu0
        %v615 = vadd.f32 %v377, %v614
        %v616 = vpop.f32.mrb[0].mxu0
        %v617 = vpop.f32.mrb[0].mxu0
        %v618 = vadd.f32 %v377, %v617
        %v619 = vpop.f32.mrb[0].mxu0
        %620 = vmatprep.mubr.bf16.mxu0 0
        %621 = vmatmul.mubr.bf16.gmra.mrb[0].mxu0 %v506
        %v622 = vpop.f32.mrb[0].mxu0
        %v623 = vadd.f32 %v377, %v622
        %v624 = vpop.f32.mrb[0].mxu0
        %v625 = vpop.f32.mrb[0].mxu0
        %v626 = vadd.f32 %v377, %v625
        %v627 = vpop.f32.mrb[0].mxu0
        %628 = vmatprep.mubr.bf16.mxu0 0
        %629 = vmatmul.mubr.bf16.gmra.mrb[0].mxu0 %v509
        %v630 = vpop.f32.mrb[0].mxu0
        %v631 = vadd.f32 %v377, %v630
        %v632 = vpop.f32.mrb[0].mxu0
        %v633 = vpop.f32.mrb[0].mxu0
        %v634 = vadd.f32 %v377, %v633
        %v635 = vpop.f32.mrb[0].mxu0
        %636 = vmatprep.mubr.bf16.mxu0 0
        %637 = vmatmul.mubr.bf16.gmra.mrb[0].mxu0 %v512
        %v638 = vpop.f32.mrb[0].mxu0
        %v639 = vadd.f32 %v377, %v638
        %v640 = vpop.f32.mrb[0].mxu0
        %v641 = vpop.f32.mrb[0].mxu0
        %v642 = vadd.f32 %v377, %v641
        %v643 = vpop.f32.mrb[0].mxu0
        %644 = vmatprep.mubr.bf16.mxu0 0
        %645 = vmatmul.mubr.bf16.gmra.mrb[0].mxu0 %v515
        %v646 = vpop.f32.mrb[0].mxu0
        %v647 = vadd.f32 %v377, %v646
        %v648 = vpop.f32.mrb[0].mxu0
        %v649 = vpop.f32.mrb[0].mxu0
        %v650 = vadd.f32 %v377, %v649
        %v651 = vpop.f32.mrb[0].mxu0
        %652 = vmatprep.mubr.bf16.mxu0 0
        %653 = vmatmul.mubr.bf16.gmra.mrb[0].mxu0 %v518
        %v654 = vpop.f32.mrb[0].mxu0
        %v655 = vadd.f32 %v377, %v654
        %v656 = vpop.f32.mrb[0].mxu0
        %v657 = vpop.f32.mrb[0].mxu0
        %v658 = vadd.f32 %v377, %v657
        %v659 = vpop.f32.mrb[0].mxu0
        %660 = vmatprep.mubr.bf16.mxu0 0
        %661 = vmatmul.mubr.bf16.gmra.mrb[0].mxu0 %v521
        %v662 = vpop.f32.mrb[0].mxu0
        %v663 = vadd.f32 %v377, %v662
        %v664 = vpop.f32.mrb[0].mxu0
        %v665 = vpop.f32.mrb[0].mxu0
        %v666 = vadd.f32 %v377, %v665
        %v667 = vpop.f32.mrb[0].mxu0
        %668 = vmatprep.mubr.bf16.mxu0 0
        %669 = vmatmul.mubr.bf16.gmra.mrb[0].mxu0 %v524
        %v670 = vpop.f32.mrb[0].mxu0
        %v671 = vadd.f32 %v377, %v670
        %v672 = vpop.f32.mrb[0].mxu0
        %v673 = vpop.f32.mrb[0].mxu0
        %v674 = vadd.f32 %v377, %v673
        %v675 = vpop.f32.mrb[0].mxu0
        %676 = vmatprep.mubr.bf16.mxu0 0
        %677 = vmatmul.mubr.bf16.gmra.mrb[0].mxu0 %v527
        %v678 = vpop.f32.mrb[0].mxu0
        %v679 = vadd.f32 %v377, %v678
        %v680 = vpop.f32.mrb[0].mxu0
        %v681 = vpop.f32.mrb[0].mxu0
        %v682 = vadd.f32 %v377, %v681
        %v683 = vpop.f32.mrb[0].mxu0
        %684 = vmatprep.mubr.bf16.mxu0 0
        %685 = vmatmul.mubr.bf16.gmra.mrb[0].mxu0 %v530
        %v686 = vpop.f32.mrb[0].mxu0
        %v687 = vadd.f32 %v377, %v686
        %v688 = vpop.f32.mrb[0].mxu0
        %v689 = vpop.f32.mrb[0].mxu0
        %v690 = vadd.f32 %v377, %v689
        %v691 = vpop.f32.mrb[0].mxu0
        %692 = vdwg.mxu0
        %v693 = vmax.f32 %v567, 0.0
        %v694 = vmax.f32 %v570, 0.0
        %v695 = vmax.f32 %v575, 0.0
        %v696 = vmax.f32 %v578, 0.0
        %v697 = vmax.f32 %v583, 0.0
        %v698 = vmax.f32 %v586, 0.0
        %v699 = vmax.f32 %v591, 0.0
        %v700 = vmax.f32 %v594, 0.0
        %v701 = vmax.f32 %v599, 0.0
        %v702 = vmax.f32 %v602, 0.0
        %v703 = vmax.f32 %v607, 0.0
        %v704 = vmax.f32 %v610, 0.0
        %v705 = vmax.f32 %v615, 0.0
        %v706 = vmax.f32 %v618, 0.0
        %v707 = vmax.f32 %v623, 0.0
        %v708 = vmax.f32 %v626, 0.0
        %v709 = vmax.f32 %v631, 0.0
        %v710 = vmax.f32 %v634, 0.0
        %v711 = vmax.f32 %v639, 0.0
        %v712 = vmax.f32 %v642, 0.0
        %v713 = vmax.f32 %v647, 0.0
        %v714 = vmax.f32 %v650, 0.0
        %v715 = vmax.f32 %v655, 0.0
        %v716 = vmax.f32 %v658, 0.0
        %v717 = vmax.f32 %v663, 0.0
        %v718 = vmax.f32 %v666, 0.0
        %v719 = vmax.f32 %v671, 0.0
        %v720 = vmax.f32 %v674, 0.0
        %v721 = vmax.f32 %v679, 0.0
        %v722 = vmax.f32 %v682, 0.0
        %v723 = vmax.f32 %v687, 0.0
        %v724 = vmax.f32 %v690, 0.0
        %v725 = vpack.c.bf16 %v694, %v693
        %v726 = vpack.c.bf16 %v696, %v695
        %v727 = vpack.c.bf16 %v698, %v697
        %v728 = vpack.c.bf16 %v700, %v699
        %v729 = vpack.c.bf16 %v702, %v701
        %v730 = vpack.c.bf16 %v704, %v703
        %v731 = vpack.c.bf16 %v706, %v705
        %v732 = vpack.c.bf16 %v708, %v707
        %v733 = vpack.c.bf16 %v710, %v709
        %v734 = vpack.c.bf16 %v712, %v711
        %v735 = vpack.c.bf16 %v714, %v713
        %v736 = vpack.c.bf16 %v716, %v715
        %v737 = vpack.c.bf16 %v718, %v717
        %v738 = vpack.c.bf16 %v720, %v719
        %v739 = vpack.c.bf16 %v722, %v721
        %v740 = vpack.c.bf16 %v724, %v723
        %v742 = vshrl.u32 %v740, 16
        %v744 = vrot.slane %v742, 7
        %v746 = vshrl.u32 %v725, 16
        %v748 = vrot.slane %v746, 7
        %v750 = vshrl.u32 %v726, 16
        %v752 = vrot.slane %v750, 7
        %v754 = vshrl.u32 %v727, 16
        %v756 = vrot.slane %v754, 7
        %v758 = vshrl.u32 %v728, 16
        %v760 = vrot.slane %v758, 7
        %v762 = vshrl.u32 %v729, 16
        %v764 = vrot.slane %v762, 7
        %v766 = vshrl.u32 %v730, 16
        %v768 = vrot.slane %v766, 7
        %v770 = vshrl.u32 %v731, 16
        %v772 = vrot.slane %v770, 7
        %v774 = vshrl.u32 %v732, 16
        %v776 = vrot.slane %v774, 7
        %v778 = vshrl.u32 %v733, 16
        %v780 = vrot.slane %v778, 7
        %v782 = vshrl.u32 %v734, 16
        %v784 = vrot.slane %v782, 7
        %v786 = vshrl.u32 %v735, 16
        %v788 = vrot.slane %v786, 7
        %v790 = vshrl.u32 %v736, 16
        %v792 = vrot.slane %v790, 7
        %v794 = vshrl.u32 %v737, 16
        %v796 = vrot.slane %v794, 7
        %v798 = vshrl.u32 %v738, 16
        %v800 = vrot.slane %v798, 7
        %v802 = vshrl.u32 %v739, 16
        %v804 = vrot.slane %v802, 7
        %v821 = vshll.u32 %v740, 16
        %v823 = vor.u32 %v744, %v821
        %v824 = vshll.u32 %v725, 16
        %v826 = vor.u32 %v748, %v824
        %v827 = vshll.u32 %v726, 16
        %v829 = vor.u32 %v752, %v827
        %v830 = vshll.u32 %v727, 16
        %v832 = vor.u32 %v756, %v830
        %v833 = vshll.u32 %v728, 16
        %v835 = vor.u32 %v760, %v833
        %v836 = vshll.u32 %v729, 16
        %v838 = vor.u32 %v764, %v836
        %v839 = vshll.u32 %v730, 16
        %v841 = vor.u32 %v768, %v839
        %v842 = vshll.u32 %v731, 16
        %v844 = vor.u32 %v772, %v842
        %v845 = vshll.u32 %v732, 16
        %v847 = vor.u32 %v776, %v845
        %v848 = vshll.u32 %v733, 16
        %v850 = vor.u32 %v780, %v848
        %v851 = vshll.u32 %v734, 16
        %v853 = vor.u32 %v784, %v851
        %v854 = vshll.u32 %v735, 16
        %v856 = vor.u32 %v788, %v854
        %v857 = vshll.u32 %v736, 16
        %v859 = vor.u32 %v792, %v857
        %v860 = vshll.u32 %v737, 16
        %v862 = vor.u32 %v796, %v860
        %v863 = vshll.u32 %v738, 16
        %v865 = vor.u32 %v800, %v863
        %v866 = vshll.u32 %v739, 16
        %v868 = vor.u32 %v804, %v866
        %vm901 = vcmask 1040384
        %vm902 = vsmask.f32 256
        %vm903 = vmand %vm901, %vm902
        %v904 = vsel %vm903, %v744, %v823
        %v905 = vsel %vm903, %v748, %v826
        %v906 = vsel %vm903, %v752, %v829
        %v907 = vsel %vm903, %v756, %v832
        %v908 = vsel %vm903, %v760, %v835
        %v909 = vsel %vm903, %v764, %v838
        %v910 = vsel %vm903, %v768, %v841
        %v911 = vsel %vm903, %v772, %v844
        %v912 = vsel %vm903, %v776, %v847
        %v913 = vsel %vm903, %v780, %v850
        %v914 = vsel %vm903, %v784, %v853
        %v915 = vsel %vm903, %v788, %v856
        %v916 = vsel %vm903, %v792, %v859
        %v917 = vsel %vm903, %v796, %v862
        %v918 = vsel %vm903, %v800, %v865
        %v919 = vsel %vm903, %v804, %v868
        %v920 = vsel %vm903, %v744, %v821
        %v921 = vsel %vm903, %v748, %v824
        %v922 = vsel %vm903, %v752, %v827
        %v923 = vsel %vm903, %v756, %v830
        %v924 = vsel %vm903, %v760, %v833
        %v925 = vsel %vm903, %v764, %v836
        %v926 = vsel %vm903, %v768, %v839
        %v927 = vsel %vm903, %v772, %v842
        %v928 = vsel %vm903, %v776, %v845
        %v929 = vsel %vm903, %v780, %v848
        %v930 = vsel %vm903, %v784, %v851
        %v931 = vsel %vm903, %v788, %v854
        %v932 = vsel %vm903, %v792, %v857
        %v933 = vsel %vm903, %v796, %v860
        %v934 = vsel %vm903, %v800, %v863
        %v935 = vsel %vm903, %v804, %v866
        %vm936 = vsmask.f32 7424
        %v938 = vshrl.u32 %v904, 16
        %v940 = vshll.u32 %v904, 16
        %v942 = vrot.slane %v940, 1
        %v943 = vor.u32 %v938, %v942
        %v945 = vshll.u32 %v920, 16
        %v947 = vrot.slane %v945, 1
        %v948 = vsel %vm936, %v943, %v947
        %v950 = vshrl.u32 %v905, 16
        %v952 = vshll.u32 %v905, 16
        %v954 = vrot.slane %v952, 1
        %v955 = vor.u32 %v950, %v954
        %v957 = vshll.u32 %v921, 16
        %v959 = vrot.slane %v957, 1
        %v960 = vsel %vm936, %v955, %v959
        %v962 = vshrl.u32 %v906, 16
        %v964 = vshll.u32 %v906, 16
        %v966 = vrot.slane %v964, 1
        %v967 = vor.u32 %v962, %v966
        %v969 = vshll.u32 %v922, 16
        %v971 = vrot.slane %v969, 1
        %v972 = vsel %vm936, %v967, %v971
        %v974 = vshrl.u32 %v907, 16
        %v976 = vshll.u32 %v907, 16
        %v978 = vrot.slane %v976, 1
        %v979 = vor.u32 %v974, %v978
        %v981 = vshll.u32 %v923, 16
        %v983 = vrot.slane %v981, 1
        %v984 = vsel %vm936, %v979, %v983
        %v986 = vshrl.u32 %v908, 16
        %v988 = vshll.u32 %v908, 16
        %v990 = vrot.slane %v988, 1
        %v991 = vor.u32 %v986, %v990
        %v993 = vshll.u32 %v924, 16
        %v995 = vrot.slane %v993, 1
        %v996 = vsel %vm936, %v991, %v995
        %v998 = vshrl.u32 %v909, 16
        %v1000 = vshll.u32 %v909, 16
        %v1002 = vrot.slane %v1000, 1
        %v1003 = vor.u32 %v998, %v1002
        %v1005 = vshll.u32 %v925, 16
        %v1007 = vrot.slane %v1005, 1
        %v1008 = vsel %vm936, %v1003, %v1007
        %v1010 = vshrl.u32 %v910, 16
        %v1012 = vshll.u32 %v910, 16
        %v1014 = vrot.slane %v1012, 1
        %v1015 = vor.u32 %v1010, %v1014
        %v1017 = vshll.u32 %v926, 16
        %v1019 = vrot.slane %v1017, 1
        %v1020 = vsel %vm936, %v1015, %v1019
        %v1022 = vshrl.u32 %v911, 16
        %v1024 = vshll.u32 %v911, 16
        %v1026 = vrot.slane %v1024, 1
        %v1027 = vor.u32 %v1022, %v1026
        %v1029 = vshll.u32 %v927, 16
        %v1031 = vrot.slane %v1029, 1
        %v1032 = vsel %vm936, %v1027, %v1031
        %v1034 = vshrl.u32 %v912, 16
        %v1036 = vshll.u32 %v912, 16
        %v1038 = vrot.slane %v1036, 1
        %v1039 = vor.u32 %v1034, %v1038
        %v1041 = vshll.u32 %v928, 16
        %v1043 = vrot.slane %v1041, 1
        %v1044 = vsel %vm936, %v1039, %v1043
        %v1046 = vshrl.u32 %v913, 16
        %v1048 = vshll.u32 %v913, 16
        %v1050 = vrot.slane %v1048, 1
        %v1051 = vor.u32 %v1046, %v1050
        %v1053 = vshll.u32 %v929, 16
        %v1055 = vrot.slane %v1053, 1
        %v1056 = vsel %vm936, %v1051, %v1055
        %v1058 = vshrl.u32 %v914, 16
        %v1060 = vshll.u32 %v914, 16
        %v1062 = vrot.slane %v1060, 1
        %v1063 = vor.u32 %v1058, %v1062
        %v1065 = vshll.u32 %v930, 16
        %v1067 = vrot.slane %v1065, 1
        %v1068 = vsel %vm936, %v1063, %v1067
        %v1070 = vshrl.u32 %v915, 16
        %v1072 = vshll.u32 %v915, 16
        %v1074 = vrot.slane %v1072, 1
        %v1075 = vor.u32 %v1070, %v1074
        %v1077 = vshll.u32 %v931, 16
        %v1079 = vrot.slane %v1077, 1
        %v1080 = vsel %vm936, %v1075, %v1079
        %v1082 = vshrl.u32 %v916, 16
        %v1084 = vshll.u32 %v916, 16
        %v1086 = vrot.slane %v1084, 1
        %v1087 = vor.u32 %v1082, %v1086
        %v1089 = vshll.u32 %v932, 16
        %v1091 = vrot.slane %v1089, 1
        %v1092 = vsel %vm936, %v1087, %v1091
        %v1094 = vshrl.u32 %v917, 16
        %v1096 = vshll.u32 %v917, 16
        %v1098 = vrot.slane %v1096, 1
        %v1099 = vor.u32 %v1094, %v1098
        %v1101 = vshll.u32 %v933, 16
        %v1103 = vrot.slane %v1101, 1
        %v1104 = vsel %vm936, %v1099, %v1103
        %v1106 = vshrl.u32 %v918, 16
        %v1108 = vshll.u32 %v918, 16
        %v1110 = vrot.slane %v1108, 1
        %v1111 = vor.u32 %v1106, %v1110
        %v1113 = vshll.u32 %v934, 16
        %v1115 = vrot.slane %v1113, 1
        %v1116 = vsel %vm936, %v1111, %v1115
        %v1118 = vshrl.u32 %v919, 16
        %v1120 = vshll.u32 %v919, 16
        %v1122 = vrot.slane %v1120, 1
        %v1123 = vor.u32 %v1118, %v1122
        %v1125 = vshll.u32 %v935, 16
        %v1127 = vrot.slane %v1125, 1
        %v1128 = vsel %vm936, %v1123, %v1127
        %1129 = vrot.lane.b32.xlu0 %v948, 64
        %v1130 = vpop.permute.xlu0 %1129
        %1131 = vrot.lane.b32.xlu0 %v960, 64
        %v1132 = vpop.permute.xlu0 %1131
        %1133 = vrot.lane.b32.xlu0 %v972, 64
        %v1134 = vpop.permute.xlu0 %1133
        %1135 = vrot.lane.b32.xlu0 %v984, 64
        %v1136 = vpop.permute.xlu0 %1135
        %1137 = vrot.lane.b32.xlu0 %v996, 64
        %v1138 = vpop.permute.xlu0 %1137
        %1139 = vrot.lane.b32.xlu0 %v1008, 64
        %v1140 = vpop.permute.xlu0 %1139
        %1141 = vrot.lane.b32.xlu0 %v1020, 64
        %v1142 = vpop.permute.xlu0 %1141
        %1143 = vrot.lane.b32.xlu0 %v1032, 64
        %v1144 = vpop.permute.xlu0 %1143
        %1145 = vrot.lane.b32.xlu0 %v1044, 64
        %v1146 = vpop.permute.xlu0 %1145
        %1147 = vrot.lane.b32.xlu0 %v1056, 64
        %v1148 = vpop.permute.xlu0 %1147
        %1149 = vrot.lane.b32.xlu0 %v1068, 64
        %v1150 = vpop.permute.xlu0 %1149
        %1151 = vrot.lane.b32.xlu0 %v1080, 64
        %v1152 = vpop.permute.xlu0 %1151
        %1153 = vrot.lane.b32.xlu0 %v1092, 64
        %v1154 = vpop.permute.xlu0 %1153
        %1155 = vrot.lane.b32.xlu0 %v1104, 64
        %v1156 = vpop.permute.xlu0 %1155
        %1157 = vrot.lane.b32.xlu0 %v1116, 64
        %v1158 = vpop.permute.xlu0 %1157
        %1159 = vrot.lane.b32.xlu0 %v1128, 64
        %v1160 = vpop.permute.xlu0 %1159
        %vm1193 = vcmask 1046528
        %v1194 = vrot.slane %v904, 1
        %v1195 = vrot.slane %v920, 1
        %v1196 = vsel %vm1193, %v1194, %v1195
        %v1197 = vrot.slane %v905, 1
        %v1198 = vrot.slane %v921, 1
        %v1199 = vsel %vm1193, %v1197, %v1198
        %v1200 = vrot.slane %v906, 1
        %v1201 = vrot.slane %v922, 1
        %v1202 = vsel %vm1193, %v1200, %v1201
        %v1203 = vrot.slane %v907, 1
        %v1204 = vrot.slane %v923, 1
        %v1205 = vsel %vm1193, %v1203, %v1204
        %v1206 = vrot.slane %v908, 1
        %v1207 = vrot.slane %v924, 1
        %v1208 = vsel %vm1193, %v1206, %v1207
        %v1209 = vrot.slane %v909, 1
        %v1210 = vrot.slane %v925, 1
        %v1211 = vsel %vm1193, %v1209, %v1210
        %v1212 = vrot.slane %v910, 1
        %v1213 = vrot.slane %v926, 1
        %v1214 = vsel %vm1193, %v1212, %v1213
        %v1215 = vrot.slane %v911, 1
        %v1216 = vrot.slane %v927, 1
        %v1217 = vsel %vm1193, %v1215, %v1216
        %v1218 = vrot.slane %v912, 1
        %v1219 = vrot.slane %v928, 1
        %v1220 = vsel %vm1193, %v1218, %v1219
        %v1221 = vrot.slane %v913, 1
        %v1222 = vrot.slane %v929, 1
        %v1223 = vsel %vm1193, %v1221, %v1222
        %v1224 = vrot.slane %v914, 1
        %v1225 = vrot.slane %v930, 1
        %v1226 = vsel %vm1193, %v1224, %v1225
        %v1227 = vrot.slane %v915, 1
        %v1228 = vrot.slane %v931, 1
        %v1229 = vsel %vm1193, %v1227, %v1228
        %v1230 = vrot.slane %v916, 1
        %v1231 = vrot.slane %v932, 1
        %v1232 = vsel %vm1193, %v1230, %v1231
        %v1233 = vrot.slane %v917, 1
        %v1234 = vrot.slane %v933, 1
        %v1235 = vsel %vm1193, %v1233, %v1234
        %v1236 = vrot.slane %v918, 1
        %v1237 = vrot.slane %v934, 1
        %v1238 = vsel %vm1193, %v1236, %v1237
        %v1239 = vrot.slane %v919, 1
        %v1240 = vrot.slane %v935, 1
        %v1241 = vsel %vm1193, %v1239, %v1240
        %1242 = vrot.lane.b32.xlu0 %v905, 64
        %v1243 = vpop.permute.xlu0 %1242
        %1244 = vrot.lane.b32.xlu0 %v906, 64
        %v1245 = vpop.permute.xlu0 %1244
        %1246 = vrot.lane.b32.xlu0 %v907, 64
        %v1247 = vpop.permute.xlu0 %1246
        %1248 = vrot.lane.b32.xlu0 %v908, 64
        %v1249 = vpop.permute.xlu0 %1248
        %1250 = vrot.lane.b32.xlu0 %v909, 64
        %v1251 = vpop.permute.xlu0 %1250
        %1252 = vrot.lane.b32.xlu0 %v910, 64
        %v1253 = vpop.permute.xlu0 %1252
        %1254 = vrot.lane.b32.xlu0 %v911, 64
        %v1255 = vpop.permute.xlu0 %1254
        %1256 = vrot.lane.b32.xlu0 %v912, 64
        %v1257 = vpop.permute.xlu0 %1256
        %1258 = vrot.lane.b32.xlu0 %v913, 64
        %v1259 = vpop.permute.xlu0 %1258
        %1260 = vrot.lane.b32.xlu0 %v914, 64
        %v1261 = vpop.permute.xlu0 %1260
        %1262 = vrot.lane.b32.xlu0 %v915, 64
        %v1263 = vpop.permute.xlu0 %1262
        %1264 = vrot.lane.b32.xlu0 %v916, 64
        %v1265 = vpop.permute.xlu0 %1264
        %1266 = vrot.lane.b32.xlu0 %v917, 64
        %v1267 = vpop.permute.xlu0 %1266
        %1268 = vrot.lane.b32.xlu0 %v918, 64
        %v1269 = vpop.permute.xlu0 %1268
        %1270 = vrot.lane.b32.xlu0 %v919, 64
        %v1271 = vpop.permute.xlu0 %1270
        %1272 = vrot.lane.b32.xlu0 %v904, 64
        %v1273 = vpop.permute.xlu0 %1272
        %1274 = vrot.lane.b32.xlu0 %v1199, 64
        %v1275 = vpop.permute.xlu0 %1274
        %1276 = vrot.lane.b32.xlu0 %v1202, 64
        %v1277 = vpop.permute.xlu0 %1276
        %1278 = vrot.lane.b32.xlu0 %v1205, 64
        %v1279 = vpop.permute.xlu0 %1278
        %1280 = vrot.lane.b32.xlu0 %v1208, 64
        %v1281 = vpop.permute.xlu0 %1280
        %1282 = vrot.lane.b32.xlu0 %v1211, 64
        %v1283 = vpop.permute.xlu0 %1282
        %1284 = vrot.lane.b32.xlu0 %v1214, 64
        %v1285 = vpop.permute.xlu0 %1284
        %1286 = vrot.lane.b32.xlu0 %v1217, 64
        %v1287 = vpop.permute.xlu0 %1286
        %1288 = vrot.lane.b32.xlu0 %v1220, 64
        %v1289 = vpop.permute.xlu0 %1288
        %1290 = vrot.lane.b32.xlu0 %v1223, 64
        %v1291 = vpop.permute.xlu0 %1290
        %1292 = vrot.lane.b32.xlu0 %v1226, 64
        %v1293 = vpop.permute.xlu0 %1292
        %1294 = vrot.lane.b32.xlu0 %v1229, 64
        %v1295 = vpop.permute.xlu0 %1294
        %1296 = vrot.lane.b32.xlu0 %v1232, 64
        %v1297 = vpop.permute.xlu0 %1296
        %1298 = vrot.lane.b32.xlu0 %v1235, 64
        %v1299 = vpop.permute.xlu0 %1298
        %1300 = vrot.lane.b32.xlu0 %v1238, 64
        %v1301 = vpop.permute.xlu0 %1300
        %1302 = vrot.lane.b32.xlu0 %v1241, 64
        %v1303 = vpop.permute.xlu0 %1302
        %1304 = vrot.lane.b32.xlu0 %v1196, 64
        %v1305 = vpop.permute.xlu0 %1304
        %v1307 = vsel %vm483, %v904, %v1130
        %v1310 = vsel %vm483, %v905, %v1132
        %v1313 = vsel %vm483, %v906, %v1134
        %v1316 = vsel %vm483, %v907, %v1136
        %v1319 = vsel %vm483, %v908, %v1138
        %v1322 = vsel %vm483, %v909, %v1140
        %v1325 = vsel %vm483, %v910, %v1142
        %v1328 = vsel %vm483, %v911, %v1144
        %v1331 = vsel %vm483, %v912, %v1146
        %v1334 = vsel %vm483, %v913, %v1148
        %v1337 = vsel %vm483, %v914, %v1150
        %v1340 = vsel %vm483, %v915, %v1152
        %v1343 = vsel %vm483, %v916, %v1154
        %v1346 = vsel %vm483, %v917, %v1156
        %v1349 = vsel %vm483, %v918, %v1158
        %v1352 = vsel %vm483, %v919, %v1160
        %v1356 = vsel %vm483, %v1196, %v1243
        %v1360 = vsel %vm483, %v1199, %v1245
        %v1364 = vsel %vm483, %v1202, %v1247
        %v1368 = vsel %vm483, %v1205, %v1249
        %v1372 = vsel %vm483, %v1208, %v1251
        %v1376 = vsel %vm483, %v1211, %v1253
        %v1380 = vsel %vm483, %v1214, %v1255
        %v1384 = vsel %vm483, %v1217, %v1257
        %v1388 = vsel %vm483, %v1220, %v1259
        %v1392 = vsel %vm483, %v1223, %v1261
        %v1396 = vsel %vm483, %v1226, %v1263
        %v1400 = vsel %vm483, %v1229, %v1265
        %v1404 = vsel %vm483, %v1232, %v1267
        %v1408 = vsel %vm483, %v1235, %v1269
        %v1412 = vsel %vm483, %v1238, %v1271
        %v1416 = vsel %vm483, %v1241, %v1273
        %v1420 = vsel %vm483, %v960, %v1275
        %v1424 = vsel %vm483, %v972, %v1277
        %v1428 = vsel %vm483, %v984, %v1279
        %v1432 = vsel %vm483, %v996, %v1281
        %v1436 = vsel %vm483, %v1008, %v1283
        %v1440 = vsel %vm483, %v1020, %v1285
        %v1444 = vsel %vm483, %v1032, %v1287
        %v1448 = vsel %vm483, %v1044, %v1289
        %v1452 = vsel %vm483, %v1056, %v1291
        %v1456 = vsel %vm483, %v1068, %v1293
        %v1460 = vsel %vm483, %v1080, %v1295
        %v1464 = vsel %vm483, %v1092, %v1297
        %v1468 = vsel %vm483, %v1104, %v1299
        %v1472 = vsel %vm483, %v1116, %v1301
        %v1476 = vsel %vm483, %v1128, %v1303
        %v1480 = vsel %vm483, %v948, %v1305
        %v1482 = vld [vmem:[%s3] sm:$0xf]
        %v1483 = vld [vmem:[%s3 + $0x4] sm:$0xf]
        %v1484 = vld [vmem:[%s3 + $0x8] sm:$0xf]
        %v1485 = vld [vmem:[%s3 + $0xc] sm:$0xf]
        %v1486 = vld [vmem:[%s3 + $0x10] sm:$0xf]
        %v1487 = vld [vmem:[%s3 + $0x14] sm:$0xf]
        %v1488 = vld [vmem:[%s3 + $0x18] sm:$0xf]
        %v1489 = vld [vmem:[%s3 + $0x1c] sm:$0xf]
        %v1490 = vld [vmem:[%s3 + $0x20] sm:$0xf]
        %v1491 = vld [vmem:[%s3 + $0x24] sm:$0xf]
        %v1492 = vld [vmem:[%s3 + $0x28] sm:$0xf]
        %v1493 = vld [vmem:[%s3 + $0x2c] sm:$0xf]
        %v1494 = vld [vmem:[%s3 + $0x30] sm:$0xf]
        %v1495 = vld [vmem:[%s3 + $0x34] sm:$0xf]
        %v1496 = vld [vmem:[%s3 + $0x38] sm:$0xf]
        %v1497 = vld [vmem:[%s3 + $0x3c] sm:$0xf]
        %v1498 = vld [vmem:[%s3 + $0x40] sm:$0xf]
        %v1499 = vld [vmem:[%s3 + $0x44] sm:$0xf]
        %v1500 = vld [vmem:[%s3 + $0x48] sm:$0xf]
        %v1501 = vld [vmem:[%s3 + $0x4c] sm:$0xf]
        %v1502 = vld [vmem:[%s3 + $0x50] sm:$0xf]
        %v1503 = vld [vmem:[%s3 + $0x54] sm:$0xf]
        %v1504 = vld [vmem:[%s3 + $0x58] sm:$0xf]
        %v1505 = vld [vmem:[%s3 + $0x5c] sm:$0xf]
        %v1506 = vld [vmem:[%s3 + $0x60] sm:$0xf]
        %v1507 = vld [vmem:[%s3 + $0x64] sm:$0xf]
        %v1508 = vld [vmem:[%s3 + $0x68] sm:$0xf]
        %v1509 = vld [vmem:[%s3 + $0x6c] sm:$0xf]
        %v1510 = vld [vmem:[%s3 + $0x70] sm:$0xf]
        %v1511 = vld [vmem:[%s3 + $0x74] sm:$0xf]
        %v1512 = vld [vmem:[%s3 + $0x78] sm:$0xf]
        %v1513 = vld [vmem:[%s3 + $0x7c] sm:$0xf]
        %v1514 = vld [vmem:[%s3 + $0x80] sm:$0xf]
        %v1515 = vld [vmem:[%s3 + $0x84] sm:$0xf]
        %v1516 = vld [vmem:[%s3 + $0x88] sm:$0xf]
        %v1517 = vld [vmem:[%s3 + $0x8c] sm:$0xf]
        %v1518 = vld [vmem:[%s3 + $0x90] sm:$0xf]
        %v1519 = vld [vmem:[%s3 + $0x94] sm:$0xf]
        %v1520 = vld [vmem:[%s3 + $0x98] sm:$0xf]
        %v1521 = vld [vmem:[%s3 + $0x9c] sm:$0xf]
        %v1522 = vld [vmem:[%s3 + $0xa0] sm:$0xf]
        %v1523 = vld [vmem:[%s3 + $0xa4] sm:$0xf]
        %v1524 = vld [vmem:[%s3 + $0xa8] sm:$0xf]
        %v1525 = vld [vmem:[%s3 + $0xac] sm:$0xf]
        %v1526 = vld [vmem:[%s3 + $0xb0] sm:$0xf]
        %v1527 = vld [vmem:[%s3 + $0xb4] sm:$0xf]
        %v1528 = vld [vmem:[%s3 + $0xb8] sm:$0xf]
        %v1529 = vld [vmem:[%s3 + $0xbc] sm:$0xf]
        %v1530 = vld [vmem:[%s3 + $0xc0] sm:$0xf]
        %v1531 = vld [vmem:[%s3 + $0xc4] sm:$0xf]
        %v1532 = vld [vmem:[%s3 + $0xc8] sm:$0xf]
        %v1533 = vld [vmem:[%s3 + $0xcc] sm:$0xf]
        %v1534 = vld [vmem:[%s3 + $0xd0] sm:$0xf]
        %v1535 = vld [vmem:[%s3 + $0xd4] sm:$0xf]
        %v1536 = vld [vmem:[%s3 + $0xd8] sm:$0xf]
        %v1537 = vld [vmem:[%s3 + $0xdc] sm:$0xf]
        %v1538 = vld [vmem:[%s3 + $0xe0] sm:$0xf]
        %v1539 = vld [vmem:[%s3 + $0xe4] sm:$0xf]
        %v1540 = vld [vmem:[%s3 + $0xe8] sm:$0xf]
        %v1541 = vld [vmem:[%s3 + $0xec] sm:$0xf]
        %v1542 = vld [vmem:[%s3 + $0xf0] sm:$0xf]
        %v1543 = vld [vmem:[%s3 + $0xf4] sm:$0xf]
        %v1544 = vld [vmem:[%s3 + $0xf8] sm:$0xf]
        %v1545 = vld [vmem:[%s3 + $0xfc] sm:$0xf]
        %v1546 = vld [vmem:[%s3 + $0x100] sm:$0xf]
        %v1547 = vld [vmem:[%s3 + $0x104] sm:$0xf]
        %v1548 = vld [vmem:[%s3 + $0x108] sm:$0xf]
        %v1549 = vld [vmem:[%s3 + $0x10c] sm:$0xf]
        %v1550 = vld [vmem:[%s3 + $0x110] sm:$0xf]
        %v1551 = vld [vmem:[%s3 + $0x114] sm:$0xf]
        %v1552 = vld [vmem:[%s3 + $0x118] sm:$0xf]
        %v1553 = vld [vmem:[%s3 + $0x11c] sm:$0xf]
        %v1554 = vld [vmem:[%s4] sm:$0x1]
        %v1556 = vlaneseq
        %v1557 = vshrl.u32 %v1556, 7
        %v1558 = vsub.s32 0, %v1557
        %v1559 = vrot.slane %v1554, %v1558
        %v1633 = vunpack.c.l.b16 %v1482
        %v1634 = vunpack.c.l.b16 %v1483
        %v1635 = vunpack.c.l.b16 %v1484
        %v1636 = vunpack.c.l.b16 %v1485
        %v1637 = vunpack.c.l.b16 %v1486
        %v1638 = vunpack.c.l.b16 %v1487
        %v1639 = vunpack.c.l.b16 %v1488
        %v1640 = vunpack.c.l.b16 %v1489
        %v1641 = vunpack.c.l.b16 %v1490
        %v1642 = vunpack.c.l.b16 %v1491
        %v1643 = vunpack.c.l.b16 %v1492
        %v1644 = vunpack.c.l.b16 %v1493
        %v1645 = vunpack.c.l.b16 %v1494
        %v1646 = vunpack.c.l.b16 %v1495
        %v1647 = vunpack.c.l.b16 %v1496
        %v1648 = vunpack.c.l.b16 %v1497
        %v1649 = vunpack.c.l.b16 %v1498
        %v1650 = vunpack.c.l.b16 %v1499
        %v1651 = vunpack.c.l.b16 %v1500
        %v1652 = vunpack.c.l.b16 %v1501
        %v1653 = vunpack.c.l.b16 %v1502
        %v1654 = vunpack.c.l.b16 %v1503
        %v1655 = vunpack.c.l.b16 %v1504
        %v1656 = vunpack.c.l.b16 %v1505
        %v1657 = vunpack.c.l.b16 %v1506
        %v1658 = vunpack.c.l.b16 %v1507
        %v1659 = vunpack.c.l.b16 %v1508
        %v1660 = vunpack.c.l.b16 %v1509
        %v1661 = vunpack.c.l.b16 %v1510
        %v1662 = vunpack.c.l.b16 %v1511
        %v1663 = vunpack.c.l.b16 %v1512
        %v1664 = vunpack.c.l.b16 %v1513
        %v1665 = vunpack.c.l.b16 %v1514
        %v1666 = vunpack.c.l.b16 %v1515
        %v1667 = vunpack.c.l.b16 %v1516
        %v1668 = vunpack.c.l.b16 %v1517
        %v1669 = vunpack.c.l.b16 %v1518
        %v1670 = vunpack.c.l.b16 %v1519
        %v1671 = vunpack.c.l.b16 %v1520
        %v1672 = vunpack.c.l.b16 %v1521
        %v1673 = vunpack.c.l.b16 %v1522
        %v1674 = vunpack.c.l.b16 %v1523
        %v1675 = vunpack.c.l.b16 %v1524
        %v1676 = vunpack.c.l.b16 %v1525
        %v1677 = vunpack.c.l.b16 %v1526
        %v1678 = vunpack.c.l.b16 %v1527
        %v1679 = vunpack.c.l.b16 %v1528
        %v1680 = vunpack.c.l.b16 %v1529
        %v1681 = vunpack.c.l.b16 %v1530
        %v1682 = vunpack.c.l.b16 %v1531
        %v1683 = vunpack.c.l.b16 %v1532
        %v1684 = vunpack.c.l.b16 %v1533
        %v1685 = vunpack.c.l.b16 %v1534
        %v1686 = vunpack.c.l.b16 %v1535
        %v1687 = vunpack.c.l.b16 %v1536
        %v1688 = vunpack.c.l.b16 %v1537
        %v1689 = vunpack.c.l.b16 %v1538
        %v1690 = vunpack.c.l.b16 %v1539
        %v1691 = vunpack.c.l.b16 %v1540
        %v1692 = vunpack.c.l.b16 %v1541
        %v1693 = vunpack.c.l.b16 %v1542
        %v1694 = vunpack.c.l.b16 %v1543
        %v1695 = vunpack.c.l.b16 %v1544
        %v1696 = vunpack.c.l.b16 %v1545
        %v1697 = vunpack.c.l.b16 %v1546
        %v1698 = vunpack.c.l.b16 %v1547
        %v1699 = vunpack.c.l.b16 %v1548
        %v1700 = vunpack.c.l.b16 %v1549
        %v1701 = vunpack.c.l.b16 %v1550
        %v1702 = vunpack.c.l.b16 %v1551
        %v1703 = vunpack.c.l.b16 %v1552
        %v1704 = vunpack.c.l.b16 %v1553
        %v1705 = vpack.c.b16 %v1634, %v1633
        %v1706 = vpack.c.b16 %v1636, %v1635
        %v1707 = vpack.c.b16 %v1638, %v1637
        %v1708 = vpack.c.b16 %v1640, %v1639
        %v1709 = vpack.c.b16 %v1642, %v1641
        %v1710 = vpack.c.b16 %v1644, %v1643
        %v1711 = vpack.c.b16 %v1646, %v1645
        %v1712 = vpack.c.b16 %v1648, %v1647
        %v1713 = vpack.c.b16 %v1650, %v1649
        %v1714 = vpack.c.b16 %v1652, %v1651
        %v1715 = vpack.c.b16 %v1654, %v1653
        %v1716 = vpack.c.b16 %v1656, %v1655
        %v1717 = vpack.c.b16 %v1658, %v1657
        %v1718 = vpack.c.b16 %v1660, %v1659
        %v1719 = vpack.c.b16 %v1662, %v1661
        %v1720 = vpack.c.b16 %v1664, %v1663
        %v1721 = vpack.c.b16 %v1666, %v1665
        %v1722 = vpack.c.b16 %v1668, %v1667
        %v1723 = vpack.c.b16 %v1670, %v1669
        %v1724 = vpack.c.b16 %v1672, %v1671
        %v1725 = vpack.c.b16 %v1674, %v1673
        %v1726 = vpack.c.b16 %v1676, %v1675
        %v1727 = vpack.c.b16 %v1678, %v1677
        %v1728 = vpack.c.b16 %v1680, %v1679
        %v1729 = vpack.c.b16 %v1682, %v1681
        %v1730 = vpack.c.b16 %v1684, %v1683
        %v1731 = vpack.c.b16 %v1686, %v1685
        %v1732 = vpack.c.b16 %v1688, %v1687
        %v1733 = vpack.c.b16 %v1690, %v1689
        %v1734 = vpack.c.b16 %v1692, %v1691
        %v1735 = vpack.c.b16 %v1694, %v1693
        %v1736 = vpack.c.b16 %v1696, %v1695
        %v1737 = vpack.c.b16 %v1698, %v1697
        %v1738 = vpack.c.b16 %v1700, %v1699
        %v1739 = vpack.c.b16 %v1702, %v1701
        %v1740 = vpack.c.b16 %v1704, %v1703
        %v1777 = vsel %vm483, %v1202, 0
        %v1779 = vsel %vm483, %v1205, 0
        %v1781 = vsel %vm483, %v1208, 0
        %v1783 = vsel %vm483, %v1211, 0
        %v1785 = vsel %vm483, %v1214, 0
        %v1787 = vsel %vm483, %v1217, 0
        %v1789 = vsel %vm483, %v1220, 0
        %v1791 = vsel %vm483, %v1223, 0
        %v1793 = vsel %vm483, %v1226, 0
        %v1795 = vsel %vm483, %v1229, 0
        %v1797 = vsel %vm483, %v1232, 0
        %v1799 = vsel %vm483, %v1235, 0
        %v1801 = vsel %vm483, %v1238, 0
        %v1803 = vsel %vm483, %v1241, 0
        %v1805 = vsel %vm483, %v1196, 0
        %v1807 = vsel %vm483, %v1199, 0
        %1809 = vmatprep.subr.bf16.mxu0 0
        %1810 = vmatpush1.bf16.msra.mxu0 %v1705
        %1811 = vmatprep.subr.bf16.mxu0 0
        %1812 = vmatpush1.bf16.msra.mxu0 %v1706
        %1813 = vmatprep.subr.bf16.mxu0 0
        %1814 = vmatpush1.bf16.msra.mxu0 %v1707
        %1815 = vmatprep.subr.bf16.mxu0 0
        %1816 = vmatpush1.bf16.msra.mxu0 %v1708
        %1817 = vmatprep.subr.bf16.mxu0 0
        %1818 = vmatpush1.bf16.msra.mxu0 %v1709
        %1819 = vmatprep.subr.bf16.mxu0 0
        %1820 = vmatpush1.bf16.msra.mxu0 %v1710
        %1821 = vmatprep.subr.bf16.mxu0 0
        %1822 = vmatpush1.bf16.msra.mxu0 %v1711
        %1823 = vmatprep.subr.bf16.mxu0 0
        %1824 = vmatpush1.bf16.msra.mxu0 %v1712
        %1825 = vmatprep.subr.bf16.mxu0 0
        %1826 = vmatpush1.bf16.msra.mxu0 %v1713
        %1827 = vmatprep.subr.bf16.mxu0 0
        %1828 = vmatpush1.bf16.msra.mxu0 %v1714
        %1829 = vmatprep.subr.bf16.mxu0 0
        %1830 = vmatpush1.bf16.msra.mxu0 %v1715
        %1831 = vmatprep.subr.bf16.mxu0 0
        %1832 = vmatpush1.bf16.msra.mxu0 %v1716
        %1833 = vmatprep.subr.bf16.mxu0 0
        %1834 = vmatpush1.bf16.msra.mxu0 %v1717
        %1835 = vmatprep.subr.bf16.mxu0 0
        %1836 = vmatpush1.bf16.msra.mxu0 %v1718
        %1837 = vmatprep.subr.bf16.mxu0 0
        %1838 = vmatpush1.bf16.msra.mxu0 %v1719
        %1839 = vmatprep.subr.bf16.mxu0 0
        %1840 = vmatpush1.bf16.msra.mxu0 %v1720
        %1841 = vmatprep.mubr.bf16.mxu0 %v1356
        %1842 = vmatmul.mubr.bf16.gmra.mrb[0].mxu0 %v1307
        %v1843 = vpop.f32.mrb[0].mxu0
        %v1844 = vadd.f32 %v1559, %v1843
        %v1845 = vpop.f32.mrb[0].mxu0
        %v1846 = vpop.f32.mrb[0].mxu0
        %v1847 = vadd.f32 %v1559, %v1846
        %v1848 = vpop.f32.mrb[0].mxu0
        %1849 = vmatprep.mubr.bf16.mxu0 %v1360
        %1850 = vmatmul.mubr.bf16.gmra.mrb[0].mxu0 %v1310
        %v1851 = vpop.f32.mrb[0].mxu0
        %v1852 = vadd.f32 %v1559, %v1851
        %v1853 = vpop.f32.mrb[0].mxu0
        %v1854 = vpop.f32.mrb[0].mxu0
        %v1855 = vadd.f32 %v1559, %v1854
        %v1856 = vpop.f32.mrb[0].mxu0
        %1857 = vmatprep.mubr.bf16.mxu0 %v1364
        %1858 = vmatmul.mubr.bf16.gmra.mrb[0].mxu0 %v1313
        %v1859 = vpop.f32.mrb[0].mxu0
        %v1860 = vadd.f32 %v1559, %v1859
        %v1861 = vpop.f32.mrb[0].mxu0
        %v1862 = vpop.f32.mrb[0].mxu0
        %v1863 = vadd.f32 %v1559, %v1862
        %v1864 = vpop.f32.mrb[0].mxu0
        %1865 = vmatprep.mubr.bf16.mxu0 %v1368
        %1866 = vmatmul.mubr.bf16.gmra.mrb[0].mxu0 %v1316
        %v1867 = vpop.f32.mrb[0].mxu0
        %v1868 = vadd.f32 %v1559, %v1867
        %v1869 = vpop.f32.mrb[0].mxu0
        %v1870 = vpop.f32.mrb[0].mxu0
        %v1871 = vadd.f32 %v1559, %v1870
        %v1872 = vpop.f32.mrb[0].mxu0
        %1873 = vmatprep.mubr.bf16.mxu0 %v1372
        %1874 = vmatmul.mubr.bf16.gmra.mrb[0].mxu0 %v1319
        %v1875 = vpop.f32.mrb[0].mxu0
        %v1876 = vadd.f32 %v1559, %v1875
        %v1877 = vpop.f32.mrb[0].mxu0
        %v1878 = vpop.f32.mrb[0].mxu0
        %v1879 = vadd.f32 %v1559, %v1878
        %v1880 = vpop.f32.mrb[0].mxu0
        %1881 = vmatprep.mubr.bf16.mxu0 %v1376
        %1882 = vmatmul.mubr.bf16.gmra.mrb[0].mxu0 %v1322
        %v1883 = vpop.f32.mrb[0].mxu0
        %v1884 = vadd.f32 %v1559, %v1883
        %v1885 = vpop.f32.mrb[0].mxu0
        %v1886 = vpop.f32.mrb[0].mxu0
        %v1887 = vadd.f32 %v1559, %v1886
        %v1888 = vpop.f32.mrb[0].mxu0
        %1889 = vmatprep.mubr.bf16.mxu0 %v1380
        %1890 = vmatmul.mubr.bf16.gmra.mrb[0].mxu0 %v1325
        %v1891 = vpop.f32.mrb[0].mxu0
        %v1892 = vadd.f32 %v1559, %v1891
        %v1893 = vpop.f32.mrb[0].mxu0
        %v1894 = vpop.f32.mrb[0].mxu0
        %v1895 = vadd.f32 %v1559, %v1894
        %v1896 = vpop.f32.mrb[0].mxu0
        %1897 = vmatprep.mubr.bf16.mxu0 %v1384
        %1898 = vmatmul.mubr.bf16.gmra.mrb[0].mxu0 %v1328
        %v1899 = vpop.f32.mrb[0].mxu0
        %v1900 = vadd.f32 %v1559, %v1899
        %v1901 = vpop.f32.mrb[0].mxu0
        %v1902 = vpop.f32.mrb[0].mxu0
        %v1903 = vadd.f32 %v1559, %v1902
        %v1904 = vpop.f32.mrb[0].mxu0
        %1905 = vmatprep.mubr.bf16.mxu0 %v1388
        %1906 = vmatmul.mubr.bf16.gmra.mrb[0].mxu0 %v1331
        %v1907 = vpop.f32.mrb[0].mxu0
        %v1908 = vadd.f32 %v1559, %v1907
        %v1909 = vpop.f32.mrb[0].mxu0
        %v1910 = vpop.f32.mrb[0].mxu0
        %v1911 = vadd.f32 %v1559, %v1910
        %v1912 = vpop.f32.mrb[0].mxu0
        %1913 = vmatprep.mubr.bf16.mxu0 %v1392
        %1914 = vmatmul.mubr.bf16.gmra.mrb[0].mxu0 %v1334
        %v1915 = vpop.f32.mrb[0].mxu0
        %v1916 = vadd.f32 %v1559, %v1915
        %v1917 = vpop.f32.mrb[0].mxu0
        %v1918 = vpop.f32.mrb[0].mxu0
        %v1919 = vadd.f32 %v1559, %v1918
        %v1920 = vpop.f32.mrb[0].mxu0
        %1921 = vmatprep.mubr.bf16.mxu0 %v1396
        %1922 = vmatmul.mubr.bf16.gmra.mrb[0].mxu0 %v1337
        %v1923 = vpop.f32.mrb[0].mxu0
        %v1924 = vadd.f32 %v1559, %v1923
        %v1925 = vpop.f32.mrb[0].mxu0
        %v1926 = vpop.f32.mrb[0].mxu0
        %v1927 = vadd.f32 %v1559, %v1926
        %v1928 = vpop.f32.mrb[0].mxu0
        %1929 = vmatprep.mubr.bf16.mxu0 %v1400
        %1930 = vmatmul.mubr.bf16.gmra.mrb[0].mxu0 %v1340
        %v1931 = vpop.f32.mrb[0].mxu0
        %v1932 = vadd.f32 %v1559, %v1931
        %v1933 = vpop.f32.mrb[0].mxu0
        %v1934 = vpop.f32.mrb[0].mxu0
        %v1935 = vadd.f32 %v1559, %v1934
        %v1936 = vpop.f32.mrb[0].mxu0
        %1937 = vmatprep.mubr.bf16.mxu0 %v1404
        %1938 = vmatmul.mubr.bf16.gmra.mrb[0].mxu0 %v1343
        %v1939 = vpop.f32.mrb[0].mxu0
        %v1940 = vadd.f32 %v1559, %v1939
        %v1941 = vpop.f32.mrb[0].mxu0
        %v1942 = vpop.f32.mrb[0].mxu0
        %v1943 = vadd.f32 %v1559, %v1942
        %v1944 = vpop.f32.mrb[0].mxu0
        %1945 = vmatprep.mubr.bf16.mxu0 %v1408
        %1946 = vmatmul.mubr.bf16.gmra.mrb[0].mxu0 %v1346
        %v1947 = vpop.f32.mrb[0].mxu0
        %v1948 = vadd.f32 %v1559, %v1947
        %v1949 = vpop.f32.mrb[0].mxu0
        %v1950 = vpop.f32.mrb[0].mxu0
        %v1951 = vadd.f32 %v1559, %v1950
        %v1952 = vpop.f32.mrb[0].mxu0
        %1953 = vmatprep.mubr.bf16.mxu0 %v1412
        %1954 = vmatmul.mubr.bf16.gmra.mrb[0].mxu0 %v1349
        %v1955 = vpop.f32.mrb[0].mxu0
        %v1956 = vadd.f32 %v1559, %v1955
        %v1957 = vpop.f32.mrb[0].mxu0
        %v1958 = vpop.f32.mrb[0].mxu0
        %v1959 = vadd.f32 %v1559, %v1958
        %v1960 = vpop.f32.mrb[0].mxu0
        %1961 = vmatprep.mubr.bf16.mxu0 %v1416
        %1962 = vmatmul.mubr.bf16.gmra.mrb[0].mxu0 %v1352
        %v1963 = vpop.f32.mrb[0].mxu0
        %v1964 = vadd.f32 %v1559, %v1963
        %v1965 = vpop.f32.mrb[0].mxu0
        %v1966 = vpop.f32.mrb[0].mxu0
        %v1967 = vadd.f32 %v1559, %v1966
        %v1968 = vpop.f32.mrb[0].mxu0
        %1969 = vdwg.mxu0
        %1970 = vmatprep.subr.bf16.mxu0 0
        %1971 = vmatpush1.bf16.msra.mxu0 %v1721
        %1972 = vmatprep.subr.bf16.mxu0 0
        %1973 = vmatpush1.bf16.msra.mxu0 %v1722
        %1974 = vmatprep.subr.bf16.mxu0 0
        %1975 = vmatpush1.bf16.msra.mxu0 %v1723
        %1976 = vmatprep.subr.bf16.mxu0 0
        %1977 = vmatpush1.bf16.msra.mxu0 %v1724
        %1978 = vmatprep.subr.bf16.mxu0 0
        %1979 = vmatpush1.bf16.msra.mxu0 %v1725
        %1980 = vmatprep.subr.bf16.mxu0 0
        %1981 = vmatpush1.bf16.msra.mxu0 %v1726
        %1982 = vmatprep.subr.bf16.mxu0 0
        %1983 = vmatpush1.bf16.msra.mxu0 %v1727
        %1984 = vmatprep.subr.bf16.mxu0 0
        %1985 = vmatpush1.bf16.msra.mxu0 %v1728
        %1986 = vmatprep.subr.bf16.mxu0 0
        %1987 = vmatpush1.bf16.msra.mxu0 %v1729
        %1988 = vmatprep.subr.bf16.mxu0 0
        %1989 = vmatpush1.bf16.msra.mxu0 %v1730
        %1990 = vmatprep.subr.bf16.mxu0 0
        %1991 = vmatpush1.bf16.msra.mxu0 %v1731
        %1992 = vmatprep.subr.bf16.mxu0 0
        %1993 = vmatpush1.bf16.msra.mxu0 %v1732
        %1994 = vmatprep.subr.bf16.mxu0 0
        %1995 = vmatpush1.bf16.msra.mxu0 %v1733
        %1996 = vmatprep.subr.bf16.mxu0 0
        %1997 = vmatpush1.bf16.msra.mxu0 %v1734
        %1998 = vmatprep.subr.bf16.mxu0 0
        %1999 = vmatpush1.bf16.msra.mxu0 %v1735
        %2000 = vmatprep.subr.bf16.mxu0 0
        %2001 = vmatpush1.bf16.msra.mxu0 %v1736
        %2002 = vmatprep.mubr.bf16.mxu0 %v1313
        %2003 = vmatmul.mubr.bf16.gmra.mrb[0].mxu0 %v1420
        %v2004 = vpop.f32.mrb[0].mxu0
        %v2005 = vadd.f32 %v1844, %v2004
        %v2006 = vpop.f32.mrb[0].mxu0
        %v2007 = vpop.f32.mrb[0].mxu0
        %v2008 = vadd.f32 %v1847, %v2007
        %v2009 = vpop.f32.mrb[0].mxu0
        %2010 = vmatprep.mubr.bf16.mxu0 %v1316
        %2011 = vmatmul.mubr.bf16.gmra.mrb[0].mxu0 %v1424
        %v2012 = vpop.f32.mrb[0].mxu0
        %v2013 = vadd.f32 %v1852, %v2012
        %v2014 = vpop.f32.mrb[0].mxu0
        %v2015 = vpop.f32.mrb[0].mxu0
        %v2016 = vadd.f32 %v1855, %v2015
        %v2017 = vpop.f32.mrb[0].mxu0
        %2018 = vmatprep.mubr.bf16.mxu0 %v1319
        %2019 = vmatmul.mubr.bf16.gmra.mrb[0].mxu0 %v1428
        %v2020 = vpop.f32.mrb[0].mxu0
        %v2021 = vadd.f32 %v1860, %v2020
        %v2022 = vpop.f32.mrb[0].mxu0
        %v2023 = vpop.f32.mrb[0].mxu0
        %v2024 = vadd.f32 %v1863, %v2023
        %v2025 = vpop.f32.mrb[0].mxu0
        %2026 = vmatprep.mubr.bf16.mxu0 %v1322
        %2027 = vmatmul.mubr.bf16.gmra.mrb[0].mxu0 %v1432
        %v2028 = vpop.f32.mrb[0].mxu0
        %v2029 = vadd.f32 %v1868, %v2028
        %v2030 = vpop.f32.mrb[0].mxu0
        %v2031 = vpop.f32.mrb[0].mxu0
        %v2032 = vadd.f32 %v1871, %v2031
        %v2033 = vpop.f32.mrb[0].mxu0
        %2034 = vmatprep.mubr.bf16.mxu0 %v1325
        %2035 = vmatmul.mubr.bf16.gmra.mrb[0].mxu0 %v1436
        %v2036 = vpop.f32.mrb[0].mxu0
        %v2037 = vadd.f32 %v1876, %v2036
        %v2038 = vpop.f32.mrb[0].mxu0
        %v2039 = vpop.f32.mrb[0].mxu0
        %v2040 = vadd.f32 %v1879, %v2039
        %v2041 = vpop.f32.mrb[0].mxu0
        %2042 = vmatprep.mubr.bf16.mxu0 %v1328
        %2043 = vmatmul.mubr.bf16.gmra.mrb[0].mxu0 %v1440
        %v2044 = vpop.f32.mrb[0].mxu0
        %v2045 = vadd.f32 %v1884, %v2044
        %v2046 = vpop.f32.mrb[0].mxu0
        %v2047 = vpop.f32.mrb[0].mxu0
        %v2048 = vadd.f32 %v1887, %v2047
        %v2049 = vpop.f32.mrb[0].mxu0
        %2050 = vmatprep.mubr.bf16.mxu0 %v1331
        %2051 = vmatmul.mubr.bf16.gmra.mrb[0].mxu0 %v1444
        %v2052 = vpop.f32.mrb[0].mxu0
        %v2053 = vadd.f32 %v1892, %v2052
        %v2054 = vpop.f32.mrb[0].mxu0
        %v2055 = vpop.f32.mrb[0].mxu0
        %v2056 = vadd.f32 %v1895, %v2055
        %v2057 = vpop.f32.mrb[0].mxu0
        %2058 = vmatprep.mubr.bf16.mxu0 %v1334
        %2059 = vmatmul.mubr.bf16.gmra.mrb[0].mxu0 %v1448
        %v2060 = vpop.f32.mrb[0].mxu0
        %v2061 = vadd.f32 %v1900, %v2060
        %v2062 = vpop.f32.mrb[0].mxu0
        %v2063 = vpop.f32.mrb[0].mxu0
        %v2064 = vadd.f32 %v1903, %v2063
        %v2065 = vpop.f32.mrb[0].mxu0
        %2066 = vmatprep.mubr.bf16.mxu0 %v1337
        %2067 = vmatmul.mubr.bf16.gmra.mrb[0].mxu0 %v1452
        %v2068 = vpop.f32.mrb[0].mxu0
        %v2069 = vadd.f32 %v1908, %v2068
        %v2070 = vpop.f32.mrb[0].mxu0
        %v2071 = vpop.f32.mrb[0].mxu0
        %v2072 = vadd.f32 %v1911, %v2071
        %v2073 = vpop.f32.mrb[0].mxu0
        %2074 = vmatprep.mubr.bf16.mxu0 %v1340
        %2075 = vmatmul.mubr.bf16.gmra.mrb[0].mxu0 %v1456
        %v2076 = vpop.f32.mrb[0].mxu0
        %v2077 = vadd.f32 %v1916, %v2076
        %v2078 = vpop.f32.mrb[0].mxu0
        %v2079 = vpop.f32.mrb[0].mxu0
        %v2080 = vadd.f32 %v1919, %v2079
        %v2081 = vpop.f32.mrb[0].mxu0
        %2082 = vmatprep.mubr.bf16.mxu0 %v1343
        %2083 = vmatmul.mubr.bf16.gmra.mrb[0].mxu0 %v1460
        %v2084 = vpop.f32.mrb[0].mxu0
        %v2085 = vadd.f32 %v1924, %v2084
        %v2086 = vpop.f32.mrb[0].mxu0
        %v2087 = vpop.f32.mrb[0].mxu0
        %v2088 = vadd.f32 %v1927, %v2087
        %v2089 = vpop.f32.mrb[0].mxu0
        %2090 = vmatprep.mubr.bf16.mxu0 %v1346
        %2091 = vmatmul.mubr.bf16.gmra.mrb[0].mxu0 %v1464
        %v2092 = vpop.f32.mrb[0].mxu0
        %v2093 = vadd.f32 %v1932, %v2092
        %v2094 = vpop.f32.mrb[0].mxu0
        %v2095 = vpop.f32.mrb[0].mxu0
        %v2096 = vadd.f32 %v1935, %v2095
        %v2097 = vpop.f32.mrb[0].mxu0
        %2098 = vmatprep.mubr.bf16.mxu0 %v1349
        %2099 = vmatmul.mubr.bf16.gmra.mrb[0].mxu0 %v1468
        %v2100 = vpop.f32.mrb[0].mxu0
        %v2101 = vadd.f32 %v1940, %v2100
        %v2102 = vpop.f32.mrb[0].mxu0
        %v2103 = vpop.f32.mrb[0].mxu0
        %v2104 = vadd.f32 %v1943, %v2103
        %v2105 = vpop.f32.mrb[0].mxu0
        %2106 = vmatprep.mubr.bf16.mxu0 %v1352
        %2107 = vmatmul.mubr.bf16.gmra.mrb[0].mxu0 %v1472
        %v2108 = vpop.f32.mrb[0].mxu0
        %v2109 = vadd.f32 %v1948, %v2108
        %v2110 = vpop.f32.mrb[0].mxu0
        %v2111 = vpop.f32.mrb[0].mxu0
        %v2112 = vadd.f32 %v1951, %v2111
        %v2113 = vpop.f32.mrb[0].mxu0
        %2114 = vmatprep.mubr.bf16.mxu0 %v1307
        %2115 = vmatmul.mubr.bf16.gmra.mrb[0].mxu0 %v1476
        %v2116 = vpop.f32.mrb[0].mxu0
        %v2117 = vadd.f32 %v1956, %v2116
        %v2118 = vpop.f32.mrb[0].mxu0
        %v2119 = vpop.f32.mrb[0].mxu0
        %v2120 = vadd.f32 %v1959, %v2119
        %v2121 = vpop.f32.mrb[0].mxu0
        %2122 = vmatprep.mubr.bf16.mxu0 %v1310
        %2123 = vmatmul.mubr.bf16.gmra.mrb[0].mxu0 %v1480
        %v2124 = vpop.f32.mrb[0].mxu0
        %v2125 = vadd.f32 %v1964, %v2124
        %v2126 = vpop.f32.mrb[0].mxu0
        %v2127 = vpop.f32.mrb[0].mxu0
        %v2128 = vadd.f32 %v1967, %v2127
        %v2129 = vpop.f32.mrb[0].mxu0
        %2130 = vdwg.mxu0
        %2131 = vmatprep.subr.bf16.mxu0 0
        %2132 = vmatpush1.bf16.msra.mxu0 %v1737
        %2133 = vmatprep.subr.bf16.mxu0 0
        %2134 = vmatpush1.bf16.msra.mxu0 %v1738
        %2135 = vmatprep.subr.bf16.mxu0 0
        %2136 = vmatpush1.bf16.msra.mxu0 %v1739
        %2137 = vmatprep.subr.bf16.mxu0 0
        %2138 = vmatpush1.bf16.msra.mxu0 %v1740
        %2139 = vmatprep.subr.bf16.mxu0 0
        %2140 = vmatpush1.bf16.msra.mxu0 0
        %2141 = vmatprep.subr.bf16.mxu0 0
        %2142 = vmatpush1.bf16.msra.mxu0 0
        %2143 = vmatprep.subr.bf16.mxu0 0
        %2144 = vmatpush1.bf16.msra.mxu0 0
        %2145 = vmatprep.subr.bf16.mxu0 0
        %2146 = vmatpush1.bf16.msra.mxu0 0
        %2147 = vmatprep.subr.bf16.mxu0 0
        %2148 = vmatpush1.bf16.msra.mxu0 0
        %2149 = vmatprep.subr.bf16.mxu0 0
        %2150 = vmatpush1.bf16.msra.mxu0 0
        %2151 = vmatprep.subr.bf16.mxu0 0
        %2152 = vmatpush1.bf16.msra.mxu0 0
        %2153 = vmatprep.subr.bf16.mxu0 0
        %2154 = vmatpush1.bf16.msra.mxu0 0
        %2155 = vmatprep.subr.bf16.mxu0 0
        %2156 = vmatpush1.bf16.msra.mxu0 0
        %2157 = vmatprep.subr.bf16.mxu0 0
        %2158 = vmatpush1.bf16.msra.mxu0 0
        %2159 = vmatprep.subr.bf16.mxu0 0
        %2160 = vmatpush1.bf16.msra.mxu0 0
        %2161 = vmatprep.subr.bf16.mxu0 0
        %2162 = vmatpush1.bf16.msra.mxu0 0
        %2163 = vmatprep.mubr.bf16.mxu0 0
        %2164 = vmatmul.mubr.bf16.gmra.mrb[0].mxu0 %v1777
        %v2165 = vpop.f32.mrb[0].mxu0
        %v2166 = vadd.f32 %v2005, %v2165
        %v2167 = vpop.f32.mrb[0].mxu0
        %v2168 = vpop.f32.mrb[0].mxu0
        %v2169 = vadd.f32 %v2008, %v2168
        %v2170 = vpop.f32.mrb[0].mxu0
        %2171 = vmatprep.mubr.bf16.mxu0 0
        %2172 = vmatmul.mubr.bf16.gmra.mrb[0].mxu0 %v1779
        %v2173 = vpop.f32.mrb[0].mxu0
        %v2174 = vadd.f32 %v2013, %v2173
        %v2175 = vpop.f32.mrb[0].mxu0
        %v2176 = vpop.f32.mrb[0].mxu0
        %v2177 = vadd.f32 %v2016, %v2176
        %v2178 = vpop.f32.mrb[0].mxu0
        %2179 = vmatprep.mubr.bf16.mxu0 0
        %2180 = vmatmul.mubr.bf16.gmra.mrb[0].mxu0 %v1781
        %v2181 = vpop.f32.mrb[0].mxu0
        %v2182 = vadd.f32 %v2021, %v2181
        %v2183 = vpop.f32.mrb[0].mxu0
        %v2184 = vpop.f32.mrb[0].mxu0
        %v2185 = vadd.f32 %v2024, %v2184
        %v2186 = vpop.f32.mrb[0].mxu0
        %2187 = vmatprep.mubr.bf16.mxu0 0
        %2188 = vmatmul.mubr.bf16.gmra.mrb[0].mxu0 %v1783
        %v2189 = vpop.f32.mrb[0].mxu0
        %v2190 = vadd.f32 %v2029, %v2189
        %v2191 = vpop.f32.mrb[0].mxu0
        %v2192 = vpop.f32.mrb[0].mxu0
        %v2193 = vadd.f32 %v2032, %v2192
        %v2194 = vpop.f32.mrb[0].mxu0
        %2195 = vmatprep.mubr.bf16.mxu0 0
        %2196 = vmatmul.mubr.bf16.gmra.mrb[0].mxu0 %v1785
        %v2197 = vpop.f32.mrb[0].mxu0
        %v2198 = vadd.f32 %v2037, %v2197
        %v2199 = vpop.f32.mrb[0].mxu0
        %v2200 = vpop.f32.mrb[0].mxu0
        %v2201 = vadd.f32 %v2040, %v2200
        %v2202 = vpop.f32.mrb[0].mxu0
        %2203 = vmatprep.mubr.bf16.mxu0 0
        %2204 = vmatmul.mubr.bf16.gmra.mrb[0].mxu0 %v1787
        %v2205 = vpop.f32.mrb[0].mxu0
        %v2206 = vadd.f32 %v2045, %v2205
        %v2207 = vpop.f32.mrb[0].mxu0
        %v2208 = vpop.f32.mrb[0].mxu0
        %v2209 = vadd.f32 %v2048, %v2208
        %v2210 = vpop.f32.mrb[0].mxu0
        %2211 = vmatprep.mubr.bf16.mxu0 0
        %2212 = vmatmul.mubr.bf16.gmra.mrb[0].mxu0 %v1789
        %v2213 = vpop.f32.mrb[0].mxu0
        %v2214 = vadd.f32 %v2053, %v2213
        %v2215 = vpop.f32.mrb[0].mxu0
        %v2216 = vpop.f32.mrb[0].mxu0
        %v2217 = vadd.f32 %v2056, %v2216
        %v2218 = vpop.f32.mrb[0].mxu0
        %2219 = vmatprep.mubr.bf16.mxu0 0
        %2220 = vmatmul.mubr.bf16.gmra.mrb[0].mxu0 %v1791
        %v2221 = vpop.f32.mrb[0].mxu0
        %v2222 = vadd.f32 %v2061, %v2221
        %v2223 = vpop.f32.mrb[0].mxu0
        %v2224 = vpop.f32.mrb[0].mxu0
        %v2225 = vadd.f32 %v2064, %v2224
        %v2226 = vpop.f32.mrb[0].mxu0
        %2227 = vmatprep.mubr.bf16.mxu0 0
        %2228 = vmatmul.mubr.bf16.gmra.mrb[0].mxu0 %v1793
        %v2229 = vpop.f32.mrb[0].mxu0
        %v2230 = vadd.f32 %v2069, %v2229
        %v2231 = vpop.f32.mrb[0].mxu0
        %v2232 = vpop.f32.mrb[0].mxu0
        %v2233 = vadd.f32 %v2072, %v2232
        %v2234 = vpop.f32.mrb[0].mxu0
        %2235 = vmatprep.mubr.bf16.mxu0 0
        %2236 = vmatmul.mubr.bf16.gmra.mrb[0].mxu0 %v1795
        %v2237 = vpop.f32.mrb[0].mxu0
        %v2238 = vadd.f32 %v2077, %v2237
        %v2239 = vpop.f32.mrb[0].mxu0
        %v2240 = vpop.f32.mrb[0].mxu0
        %v2241 = vadd.f32 %v2080, %v2240
        %v2242 = vpop.f32.mrb[0].mxu0
        %2243 = vmatprep.mubr.bf16.mxu0 0
        %2244 = vmatmul.mubr.bf16.gmra.mrb[0].mxu0 %v1797
        %v2245 = vpop.f32.mrb[0].mxu0
        %v2246 = vadd.f32 %v2085, %v2245
        %v2247 = vpop.f32.mrb[0].mxu0
        %v2248 = vpop.f32.mrb[0].mxu0
        %v2249 = vadd.f32 %v2088, %v2248
        %v2250 = vpop.f32.mrb[0].mxu0
        %2251 = vmatprep.mubr.bf16.mxu0 0
        %2252 = vmatmul.mubr.bf16.gmra.mrb[0].mxu0 %v1799
        %v2253 = vpop.f32.mrb[0].mxu0
        %v2254 = vadd.f32 %v2093, %v2253
        %v2255 = vpop.f32.mrb[0].mxu0
        %v2256 = vpop.f32.mrb[0].mxu0
        %v2257 = vadd.f32 %v2096, %v2256
        %v2258 = vpop.f32.mrb[0].mxu0
        %2259 = vmatprep.mubr.bf16.mxu0 0
        %2260 = vmatmul.mubr.bf16.gmra.mrb[0].mxu0 %v1801
        %v2261 = vpop.f32.mrb[0].mxu0
        %v2262 = vadd.f32 %v2101, %v2261
        %v2263 = vpop.f32.mrb[0].mxu0
        %v2264 = vpop.f32.mrb[0].mxu0
        %v2265 = vadd.f32 %v2104, %v2264
        %v2266 = vpop.f32.mrb[0].mxu0
        %2267 = vmatprep.mubr.bf16.mxu0 0
        %2268 = vmatmul.mubr.bf16.gmra.mrb[0].mxu0 %v1803
        %v2269 = vpop.f32.mrb[0].mxu0
        %v2270 = vadd.f32 %v2109, %v2269
        %v2271 = vpop.f32.mrb[0].mxu0
        %v2272 = vpop.f32.mrb[0].mxu0
        %v2273 = vadd.f32 %v2112, %v2272
        %v2274 = vpop.f32.mrb[0].mxu0
        %2275 = vmatprep.mubr.bf16.mxu0 0
        %2276 = vmatmul.mubr.bf16.gmra.mrb[0].mxu0 %v1805
        %v2277 = vpop.f32.mrb[0].mxu0
        %v2278 = vadd.f32 %v2117, %v2277
        %v2279 = vpop.f32.mrb[0].mxu0
        %v2280 = vpop.f32.mrb[0].mxu0
        %v2281 = vadd.f32 %v2120, %v2280
        %v2282 = vpop.f32.mrb[0].mxu0
        %2283 = vmatprep.mubr.bf16.mxu0 0
        %2284 = vmatmul.mubr.bf16.gmra.mrb[0].mxu0 %v1807
        %v2285 = vpop.f32.mrb[0].mxu0
        %v2286 = vadd.f32 %v2125, %v2285
        %v2287 = vpop.f32.mrb[0].mxu0
        %v2288 = vpop.f32.mrb[0].mxu0
        %v2289 = vadd.f32 %v2128, %v2288
        %v2290 = vpop.f32.mrb[0].mxu0
        %2291 = vdwg.mxu0
        %v2292 = vmax.f32 %v2166, 0.0
        %v2293 = vmax.f32 %v2169, 0.0
        %v2294 = vmax.f32 %v2174, 0.0
        %v2295 = vmax.f32 %v2177, 0.0
        %v2296 = vmax.f32 %v2182, 0.0
        %v2297 = vmax.f32 %v2185, 0.0
        %v2298 = vmax.f32 %v2190, 0.0
        %v2299 = vmax.f32 %v2193, 0.0
        %v2300 = vmax.f32 %v2198, 0.0
        %v2301 = vmax.f32 %v2201, 0.0
        %v2302 = vmax.f32 %v2206, 0.0
        %v2303 = vmax.f32 %v2209, 0.0
        %v2304 = vmax.f32 %v2214, 0.0
        %v2305 = vmax.f32 %v2217, 0.0
        %v2306 = vmax.f32 %v2222, 0.0
        %v2307 = vmax.f32 %v2225, 0.0
        %v2308 = vmax.f32 %v2230, 0.0
        %v2309 = vmax.f32 %v2233, 0.0
        %v2310 = vmax.f32 %v2238, 0.0
        %v2311 = vmax.f32 %v2241, 0.0
        %v2312 = vmax.f32 %v2246, 0.0
        %v2313 = vmax.f32 %v2249, 0.0
        %v2314 = vmax.f32 %v2254, 0.0
        %v2315 = vmax.f32 %v2257, 0.0
        %v2316 = vmax.f32 %v2262, 0.0
        %v2317 = vmax.f32 %v2265, 0.0
        %v2318 = vmax.f32 %v2270, 0.0
        %v2319 = vmax.f32 %v2273, 0.0
        %v2320 = vmax.f32 %v2278, 0.0
        %v2321 = vmax.f32 %v2281, 0.0
        %v2322 = vmax.f32 %v2286, 0.0
        %v2323 = vmax.f32 %v2289, 0.0
        %v2324 = vpack.c.bf16 %v2293, %v2292
        %v2325 = vpack.c.bf16 %v2295, %v2294
        %v2326 = vpack.c.bf16 %v2297, %v2296
        %v2327 = vpack.c.bf16 %v2299, %v2298
        %v2328 = vpack.c.bf16 %v2301, %v2300
        %v2329 = vpack.c.bf16 %v2303, %v2302
        %v2330 = vpack.c.bf16 %v2305, %v2304
        %v2331 = vpack.c.bf16 %v2307, %v2306
        %v2332 = vpack.c.bf16 %v2309, %v2308
        %v2333 = vpack.c.bf16 %v2311, %v2310
        %v2334 = vpack.c.bf16 %v2313, %v2312
        %v2335 = vpack.c.bf16 %v2315, %v2314
        %v2336 = vpack.c.bf16 %v2317, %v2316
        %v2337 = vpack.c.bf16 %v2319, %v2318
        %v2338 = vpack.c.bf16 %v2321, %v2320
        %v2339 = vpack.c.bf16 %v2323, %v2322
        %v2340 = vld [vmem:[%s5] sm:$0xff]
        %v2341 = vld [vmem:[%s5 + $0x8] sm:$0xff]
        %v2342 = vld [vmem:[%s5 + $0x10] sm:$0xff]
        %v2343 = vld [vmem:[%s5 + $0x18] sm:$0xff]
        %v2344 = vld [vmem:[%s5 + $0x20] sm:$0xff]
        %v2345 = vld [vmem:[%s5 + $0x28] sm:$0xff]
        %v2346 = vld [vmem:[%s5 + $0x30] sm:$0xff]
        %v2347 = vld [vmem:[%s5 + $0x38] sm:$0xff]
        %v2348 = vld [vmem:[%s6] sm:$0x3]
        %v2350 = vlaneseq
        %v2351 = vshrl.u32 %v2350, 7
        %v2352 = vsub.s32 0, %v2351
        %v2353 = vrot.slane %v2348, %v2352
        %v2354 = vlaneseq
        %v2355 = vshrl.u32 %v2354, 7
        %v2356 = vsub.s32 1, %v2355
        %v2357 = vrot.slane %v2348, %v2356
        %v2368 = vunpack.c.l.b16 %v2340
        %v2369 = vunpack.c.h.b16 %v2340
        %v2370 = vunpack.c.l.b16 %v2341
        %v2371 = vunpack.c.h.b16 %v2341
        %v2372 = vunpack.c.l.b16 %v2342
        %v2373 = vunpack.c.h.b16 %v2342
        %v2374 = vunpack.c.l.b16 %v2343
        %v2375 = vunpack.c.h.b16 %v2343
        %v2376 = vunpack.c.l.b16 %v2344
        %v2377 = vunpack.c.h.b16 %v2344
        %v2378 = vunpack.c.l.b16 %v2345
        %v2379 = vunpack.c.h.b16 %v2345
        %v2380 = vunpack.c.l.b16 %v2346
        %v2381 = vunpack.c.h.b16 %v2346
        %v2382 = vunpack.c.l.b16 %v2347
        %v2383 = vunpack.c.h.b16 %v2347
        %v2384 = vpack.c.b16 %v2370, %v2368
        %v2385 = vpack.c.b16 %v2371, %v2369
        %v2386 = vpack.c.b16 %v2374, %v2372
        %v2387 = vpack.c.b16 %v2375, %v2373
        %v2388 = vpack.c.b16 %v2378, %v2376
        %v2389 = vpack.c.b16 %v2379, %v2377
        %v2390 = vpack.c.b16 %v2382, %v2380
        %v2391 = vpack.c.b16 %v2383, %v2381
        %v2401 = vsel %vm483, %v2324, 0
        %v2404 = vsel %vm483, %v2325, 0
        %v2407 = vsel %vm483, %v2326, 0
        %v2410 = vsel %vm483, %v2327, 0
        %v2413 = vsel %vm483, %v2328, 0
        %v2416 = vsel %vm483, %v2329, 0
        %v2419 = vsel %vm483, %v2330, 0
        %v2422 = vsel %vm483, %v2331, 0
        %v2425 = vsel %vm483, %v2332, 0
        %v2428 = vsel %vm483, %v2333, 0
        %v2431 = vsel %vm483, %v2334, 0
        %v2434 = vsel %vm483, %v2335, 0
        %v2437 = vsel %vm483, %v2336, 0
        %v2440 = vsel %vm483, %v2337, 0
        %v2443 = vsel %vm483, %v2338, 0
        %v2446 = vsel %vm483, %v2339, 0
        %2448 = vmatprep.subr.bf16.mxu0 %v2385
        %2449 = vmatpush1.bf16.msra.mxu0 %v2384
        %2450 = vmatprep.subr.bf16.mxu0 %v2387
        %2451 = vmatpush1.bf16.msra.mxu0 %v2386
        %2452 = vmatprep.subr.bf16.mxu0 %v2389
        %2453 = vmatpush1.bf16.msra.mxu0 %v2388
        %2454 = vmatprep.subr.bf16.mxu0 %v2391
        %2455 = vmatpush1.bf16.msra.mxu0 %v2390
        %2456 = vmatprep.subr.bf16.mxu0 0
        %2457 = vmatpush1.bf16.msra.mxu0 0
        %2458 = vmatprep.subr.bf16.mxu0 0
        %2459 = vmatpush1.bf16.msra.mxu0 0
        %2460 = vmatprep.subr.bf16.mxu0 0
        %2461 = vmatpush1.bf16.msra.mxu0 0
        %2462 = vmatprep.subr.bf16.mxu0 0
        %2463 = vmatpush1.bf16.msra.mxu0 0
        %2464 = vmatprep.subr.bf16.mxu0 0
        %2465 = vmatpush1.bf16.msra.mxu0 0
        %2466 = vmatprep.subr.bf16.mxu0 0
        %2467 = vmatpush1.bf16.msra.mxu0 0
        %2468 = vmatprep.subr.bf16.mxu0 0
        %2469 = vmatpush1.bf16.msra.mxu0 0
        %2470 = vmatprep.subr.bf16.mxu0 0
        %2471 = vmatpush1.bf16.msra.mxu0 0
        %2472 = vmatprep.subr.bf16.mxu0 0
        %2473 = vmatpush1.bf16.msra.mxu0 0
        %2474 = vmatprep.subr.bf16.mxu0 0
        %2475 = vmatpush1.bf16.msra.mxu0 0
        %2476 = vmatprep.subr.bf16.mxu0 0
        %2477 = vmatpush1.bf16.msra.mxu0 0
        %2478 = vmatprep.subr.bf16.mxu0 0
        %2479 = vmatpush1.bf16.msra.mxu0 0
        %2480 = vmatprep.mubr.bf16.mxu0 0
        %2481 = vmatmul.mubr.bf16.gmra.mrb[0].mxu0 %v2401
        %v2482 = vpop.f32.mrb[0].mxu0
        %v2483 = vadd.f32 %v2353, %v2482
        %v2484 = vpop.f32.mrb[0].mxu0
        %v2485 = vadd.f32 %v2357, %v2484
        %v2486 = vpop.f32.mrb[0].mxu0
        %v2487 = vadd.f32 %v2353, %v2486
        %v2488 = vpop.f32.mrb[0].mxu0
        %v2489 = vadd.f32 %v2357, %v2488
        %2490 = vmatprep.mubr.bf16.mxu0 0
        %2491 = vmatmul.mubr.bf16.gmra.mrb[0].mxu0 %v2404
        %v2492 = vpop.f32.mrb[0].mxu0
        %v2493 = vadd.f32 %v2353, %v2492
        %v2494 = vpop.f32.mrb[0].mxu0
        %v2495 = vadd.f32 %v2357, %v2494
        %v2496 = vpop.f32.mrb[0].mxu0
        %v2497 = vadd.f32 %v2353, %v2496
        %v2498 = vpop.f32.mrb[0].mxu0
        %v2499 = vadd.f32 %v2357, %v2498
        %2500 = vmatprep.mubr.bf16.mxu0 0
        %2501 = vmatmul.mubr.bf16.gmra.mrb[0].mxu0 %v2407
        %v2502 = vpop.f32.mrb[0].mxu0
        %v2503 = vadd.f32 %v2353, %v2502
        %v2504 = vpop.f32.mrb[0].mxu0
        %v2505 = vadd.f32 %v2357, %v2504
        %v2506 = vpop.f32.mrb[0].mxu0
        %v2507 = vadd.f32 %v2353, %v2506
        %v2508 = vpop.f32.mrb[0].mxu0
        %v2509 = vadd.f32 %v2357, %v2508
        %2510 = vmatprep.mubr.bf16.mxu0 0
        %2511 = vmatmul.mubr.bf16.gmra.mrb[0].mxu0 %v2410
        %v2512 = vpop.f32.mrb[0].mxu0
        %v2513 = vadd.f32 %v2353, %v2512
        %v2514 = vpop.f32.mrb[0].mxu0
        %v2515 = vadd.f32 %v2357, %v2514
        %v2516 = vpop.f32.mrb[0].mxu0
        %v2517 = vadd.f32 %v2353, %v2516
        %v2518 = vpop.f32.mrb[0].mxu0
        %v2519 = vadd.f32 %v2357, %v2518
        %2520 = vmatprep.mubr.bf16.mxu0 0
        %2521 = vmatmul.mubr.bf16.gmra.mrb[0].mxu0 %v2413
        %v2522 = vpop.f32.mrb[0].mxu0
        %v2523 = vadd.f32 %v2353, %v2522
        %v2524 = vpop.f32.mrb[0].mxu0
        %v2525 = vadd.f32 %v2357, %v2524
        %v2526 = vpop.f32.mrb[0].mxu0
        %v2527 = vadd.f32 %v2353, %v2526
        %v2528 = vpop.f32.mrb[0].mxu0
        %v2529 = vadd.f32 %v2357, %v2528
        %2530 = vmatprep.mubr.bf16.mxu0 0
        %2531 = vmatmul.mubr.bf16.gmra.mrb[0].mxu0 %v2416
        %v2532 = vpop.f32.mrb[0].mxu0
        %v2533 = vadd.f32 %v2353, %v2532
        %v2534 = vpop.f32.mrb[0].mxu0
        %v2535 = vadd.f32 %v2357, %v2534
        %v2536 = vpop.f32.mrb[0].mxu0
        %v2537 = vadd.f32 %v2353, %v2536
        %v2538 = vpop.f32.mrb[0].mxu0
        %v2539 = vadd.f32 %v2357, %v2538
        %2540 = vmatprep.mubr.bf16.mxu0 0
        %2541 = vmatmul.mubr.bf16.gmra.mrb[0].mxu0 %v2419
        %v2542 = vpop.f32.mrb[0].mxu0
        %v2543 = vadd.f32 %v2353, %v2542
        %v2544 = vpop.f32.mrb[0].mxu0
        %v2545 = vadd.f32 %v2357, %v2544
        %v2546 = vpop.f32.mrb[0].mxu0
        %v2547 = vadd.f32 %v2353, %v2546
        %v2548 = vpop.f32.mrb[0].mxu0
        %v2549 = vadd.f32 %v2357, %v2548
        %2550 = vmatprep.mubr.bf16.mxu0 0
        %2551 = vmatmul.mubr.bf16.gmra.mrb[0].mxu0 %v2422
        %v2552 = vpop.f32.mrb[0].mxu0
        %v2553 = vadd.f32 %v2353, %v2552
        %v2554 = vpop.f32.mrb[0].mxu0
        %v2555 = vadd.f32 %v2357, %v2554
        %v2556 = vpop.f32.mrb[0].mxu0
        %v2557 = vadd.f32 %v2353, %v2556
        %v2558 = vpop.f32.mrb[0].mxu0
        %v2559 = vadd.f32 %v2357, %v2558
        %2560 = vmatprep.mubr.bf16.mxu0 0
        %2561 = vmatmul.mubr.bf16.gmra.mrb[0].mxu0 %v2425
        %v2562 = vpop.f32.mrb[0].mxu0
        %v2563 = vadd.f32 %v2353, %v2562
        %v2564 = vpop.f32.mrb[0].mxu0
        %v2565 = vadd.f32 %v2357, %v2564
        %v2566 = vpop.f32.mrb[0].mxu0
        %v2567 = vadd.f32 %v2353, %v2566
        %v2568 = vpop.f32.mrb[0].mxu0
        %v2569 = vadd.f32 %v2357, %v2568
        %2570 = vmatprep.mubr.bf16.mxu0 0
        %2571 = vmatmul.mubr.bf16.gmra.mrb[0].mxu0 %v2428
        %v2572 = vpop.f32.mrb[0].mxu0
        %v2573 = vadd.f32 %v2353, %v2572
        %v2574 = vpop.f32.mrb[0].mxu0
        %v2575 = vadd.f32 %v2357, %v2574
        %v2576 = vpop.f32.mrb[0].mxu0
        %v2577 = vadd.f32 %v2353, %v2576
        %v2578 = vpop.f32.mrb[0].mxu0
        %v2579 = vadd.f32 %v2357, %v2578
        %2580 = vmatprep.mubr.bf16.mxu0 0
        %2581 = vmatmul.mubr.bf16.gmra.mrb[0].mxu0 %v2431
        %v2582 = vpop.f32.mrb[0].mxu0
        %v2583 = vadd.f32 %v2353, %v2582
        %v2584 = vpop.f32.mrb[0].mxu0
        %v2585 = vadd.f32 %v2357, %v2584
        %v2586 = vpop.f32.mrb[0].mxu0
        %v2587 = vadd.f32 %v2353, %v2586
        %v2588 = vpop.f32.mrb[0].mxu0
        %v2589 = vadd.f32 %v2357, %v2588
        %2590 = vmatprep.mubr.bf16.mxu0 0
        %2591 = vmatmul.mubr.bf16.gmra.mrb[0].mxu0 %v2434
        %v2592 = vpop.f32.mrb[0].mxu0
        %v2593 = vadd.f32 %v2353, %v2592
        %v2594 = vpop.f32.mrb[0].mxu0
        %v2595 = vadd.f32 %v2357, %v2594
        %v2596 = vpop.f32.mrb[0].mxu0
        %v2597 = vadd.f32 %v2353, %v2596
        %v2598 = vpop.f32.mrb[0].mxu0
        %v2599 = vadd.f32 %v2357, %v2598
        %2600 = vmatprep.mubr.bf16.mxu0 0
        %2601 = vmatmul.mubr.bf16.gmra.mrb[0].mxu0 %v2437
        %v2602 = vpop.f32.mrb[0].mxu0
        %v2603 = vadd.f32 %v2353, %v2602
        %v2604 = vpop.f32.mrb[0].mxu0
        %v2605 = vadd.f32 %v2357, %v2604
        %v2606 = vpop.f32.mrb[0].mxu0
        %v2607 = vadd.f32 %v2353, %v2606
        %v2608 = vpop.f32.mrb[0].mxu0
        %v2609 = vadd.f32 %v2357, %v2608
        %2610 = vmatprep.mubr.bf16.mxu0 0
        %2611 = vmatmul.mubr.bf16.gmra.mrb[0].mxu0 %v2440
        %v2612 = vpop.f32.mrb[0].mxu0
        %v2613 = vadd.f32 %v2353, %v2612
        %v2614 = vpop.f32.mrb[0].mxu0
        %v2615 = vadd.f32 %v2357, %v2614
        %v2616 = vpop.f32.mrb[0].mxu0
        %v2617 = vadd.f32 %v2353, %v2616
        %v2618 = vpop.f32.mrb[0].mxu0
        %v2619 = vadd.f32 %v2357, %v2618
        %2620 = vmatprep.mubr.bf16.mxu0 0
        %2621 = vmatmul.mubr.bf16.gmra.mrb[0].mxu0 %v2443
        %v2622 = vpop.f32.mrb[0].mxu0
        %v2623 = vadd.f32 %v2353, %v2622
        %v2624 = vpop.f32.mrb[0].mxu0
        %v2625 = vadd.f32 %v2357, %v2624
        %v2626 = vpop.f32.mrb[0].mxu0
        %v2627 = vadd.f32 %v2353, %v2626
        %v2628 = vpop.f32.mrb[0].mxu0
        %v2629 = vadd.f32 %v2357, %v2628
        %2630 = vmatprep.mubr.bf16.mxu0 0
        %2631 = vmatmul.mubr.bf16.gmra.mrb[0].mxu0 %v2446
        %v2632 = vpop.f32.mrb[0].mxu0
        %v2633 = vadd.f32 %v2353, %v2632
        %v2634 = vpop.f32.mrb[0].mxu0
        %v2635 = vadd.f32 %v2357, %v2634
        %v2636 = vpop.f32.mrb[0].mxu0
        %v2637 = vadd.f32 %v2353, %v2636
        %v2638 = vpop.f32.mrb[0].mxu0
        %v2639 = vadd.f32 %v2357, %v2638
        %2640 = vdwg.mxu0
        %v2641 = vld [vmem:[%s7] sm:$0xff]
        %v2642 = vld [vmem:[%s7 + $0x8] sm:$0xff]
        %v2643 = vld [vmem:[%s7 + $0x10] sm:$0xff]
        %v2644 = vld [vmem:[%s7 + $0x18] sm:$0xff]
        %v2645 = vld [vmem:[%s7 + $0x20] sm:$0xff]
        %v2646 = vld [vmem:[%s7 + $0x28] sm:$0xff]
        %v2647 = vld [vmem:[%s7 + $0x30] sm:$0xff]
        %v2648 = vld [vmem:[%s7 + $0x38] sm:$0xff]
        %v2649 = vld [vmem:[%s8] sm:$0x3]
        %v2651 = vlaneseq
        %v2652 = vshrl.u32 %v2651, 7
        %v2653 = vsub.s32 0, %v2652
        %v2654 = vrot.slane %v2649, %v2653
        %v2655 = vlaneseq
        %v2656 = vshrl.u32 %v2655, 7
        %v2657 = vsub.s32 1, %v2656
        %v2658 = vrot.slane %v2649, %v2657
        %v2669 = vunpack.c.l.b16 %v2641
        %v2670 = vunpack.c.h.b16 %v2641
        %v2671 = vunpack.c.l.b16 %v2642
        %v2672 = vunpack.c.h.b16 %v2642
        %v2673 = vunpack.c.l.b16 %v2643
        %v2674 = vunpack.c.h.b16 %v2643
        %v2675 = vunpack.c.l.b16 %v2644
        %v2676 = vunpack.c.h.b16 %v2644
        %v2677 = vunpack.c.l.b16 %v2645
        %v2678 = vunpack.c.h.b16 %v2645
        %v2679 = vunpack.c.l.b16 %v2646
        %v2680 = vunpack.c.h.b16 %v2646
        %v2681 = vunpack.c.l.b16 %v2647
        %v2682 = vunpack.c.h.b16 %v2647
        %v2683 = vunpack.c.l.b16 %v2648
        %v2684 = vunpack.c.h.b16 %v2648
        %v2685 = vpack.c.b16 %v2671, %v2669
        %v2686 = vpack.c.b16 %v2672, %v2670
        %v2687 = vpack.c.b16 %v2675, %v2673
        %v2688 = vpack.c.b16 %v2676, %v2674
        %v2689 = vpack.c.b16 %v2679, %v2677
        %v2690 = vpack.c.b16 %v2680, %v2678
        %v2691 = vpack.c.b16 %v2683, %v2681
        %v2692 = vpack.c.b16 %v2684, %v2682
        %2701 = vmatprep.subr.bf16.mxu0 %v2686
        %2702 = vmatpush1.bf16.msra.mxu0 %v2685
        %2703 = vmatprep.subr.bf16.mxu0 %v2688
        %2704 = vmatpush1.bf16.msra.mxu0 %v2687
        %2705 = vmatprep.subr.bf16.mxu0 %v2690
        %2706 = vmatpush1.bf16.msra.mxu0 %v2689
        %2707 = vmatprep.subr.bf16.mxu0 %v2692
        %2708 = vmatpush1.bf16.msra.mxu0 %v2691
        %2709 = vmatprep.subr.bf16.mxu0 0
        %2710 = vmatpush1.bf16.msra.mxu0 0
        %2711 = vmatprep.subr.bf16.mxu0 0
        %2712 = vmatpush1.bf16.msra.mxu0 0
        %2713 = vmatprep.subr.bf16.mxu0 0
        %2714 = vmatpush1.bf16.msra.mxu0 0
        %2715 = vmatprep.subr.bf16.mxu0 0
        %2716 = vmatpush1.bf16.msra.mxu0 0
        %2717 = vmatprep.subr.bf16.mxu0 0
        %2718 = vmatpush1.bf16.msra.mxu0 0
        %2719 = vmatprep.subr.bf16.mxu0 0
        %2720 = vmatpush1.bf16.msra.mxu0 0
        %2721 = vmatprep.subr.bf16.mxu0 0
        %2722 = vmatpush1.bf16.msra.mxu0 0
        %2723 = vmatprep.subr.bf16.mxu0 0
        %2724 = vmatpush1.bf16.msra.mxu0 0
        %2725 = vmatprep.subr.bf16.mxu0 0
        %2726 = vmatpush1.bf16.msra.mxu0 0
        %2727 = vmatprep.subr.bf16.mxu0 0
        %2728 = vmatpush1.bf16.msra.mxu0 0
        %2729 = vmatprep.subr.bf16.mxu0 0
        %2730 = vmatpush1.bf16.msra.mxu0 0
        %2731 = vmatprep.subr.bf16.mxu0 0
        %2732 = vmatpush1.bf16.msra.mxu0 0
        %2733 = vmatprep.mubr.bf16.mxu0 0
        %2734 = vmatmul.mubr.bf16.gmra.mrb[0].mxu0 %v485
        %v2735 = vpop.f32.mrb[0].mxu0
        %v2736 = vadd.f32 %v2654, %v2735
        %v2737 = vpop.f32.mrb[0].mxu0
        %v2738 = vadd.f32 %v2658, %v2737
        %v2739 = vpop.f32.mrb[0].mxu0
        %v2740 = vadd.f32 %v2654, %v2739
        %v2741 = vpop.f32.mrb[0].mxu0
        %v2742 = vadd.f32 %v2658, %v2741
        %2743 = vmatprep.mubr.bf16.mxu0 0
        %2744 = vmatmul.mubr.bf16.gmra.mrb[0].mxu0 %v488
        %v2745 = vpop.f32.mrb[0].mxu0
        %v2746 = vadd.f32 %v2654, %v2745
        %v2747 = vpop.f32.mrb[0].mxu0
        %v2748 = vadd.f32 %v2658, %v2747
        %v2749 = vpop.f32.mrb[0].mxu0
        %v2750 = vadd.f32 %v2654, %v2749
        %v2751 = vpop.f32.mrb[0].mxu0
        %v2752 = vadd.f32 %v2658, %v2751
        %2753 = vmatprep.mubr.bf16.mxu0 0
        %2754 = vmatmul.mubr.bf16.gmra.mrb[0].mxu0 %v491
        %v2755 = vpop.f32.mrb[0].mxu0
        %v2756 = vadd.f32 %v2654, %v2755
        %v2757 = vpop.f32.mrb[0].mxu0
        %v2758 = vadd.f32 %v2658, %v2757
        %v2759 = vpop.f32.mrb[0].mxu0
        %v2760 = vadd.f32 %v2654, %v2759
        %v2761 = vpop.f32.mrb[0].mxu0
        %v2762 = vadd.f32 %v2658, %v2761
        %2763 = vmatprep.mubr.bf16.mxu0 0
        %2764 = vmatmul.mubr.bf16.gmra.mrb[0].mxu0 %v494
        %v2765 = vpop.f32.mrb[0].mxu0
        %v2766 = vadd.f32 %v2654, %v2765
        %v2767 = vpop.f32.mrb[0].mxu0
        %v2768 = vadd.f32 %v2658, %v2767
        %v2769 = vpop.f32.mrb[0].mxu0
        %v2770 = vadd.f32 %v2654, %v2769
        %v2771 = vpop.f32.mrb[0].mxu0
        %v2772 = vadd.f32 %v2658, %v2771
        %2773 = vmatprep.mubr.bf16.mxu0 0
        %2774 = vmatmul.mubr.bf16.gmra.mrb[0].mxu0 %v497
        %v2775 = vpop.f32.mrb[0].mxu0
        %v2776 = vadd.f32 %v2654, %v2775
        %v2777 = vpop.f32.mrb[0].mxu0
        %v2778 = vadd.f32 %v2658, %v2777
        %v2779 = vpop.f32.mrb[0].mxu0
        %v2780 = vadd.f32 %v2654, %v2779
        %v2781 = vpop.f32.mrb[0].mxu0
        %v2782 = vadd.f32 %v2658, %v2781
        %2783 = vmatprep.mubr.bf16.mxu0 0
        %2784 = vmatmul.mubr.bf16.gmra.mrb[0].mxu0 %v500
        %v2785 = vpop.f32.mrb[0].mxu0
        %v2786 = vadd.f32 %v2654, %v2785
        %v2787 = vpop.f32.mrb[0].mxu0
        %v2788 = vadd.f32 %v2658, %v2787
        %v2789 = vpop.f32.mrb[0].mxu0
        %v2790 = vadd.f32 %v2654, %v2789
        %v2791 = vpop.f32.mrb[0].mxu0
        %v2792 = vadd.f32 %v2658, %v2791
        %2793 = vmatprep.mubr.bf16.mxu0 0
        %2794 = vmatmul.mubr.bf16.gmra.mrb[0].mxu0 %v503
        %v2795 = vpop.f32.mrb[0].mxu0
        %v2796 = vadd.f32 %v2654, %v2795
        %v2797 = vpop.f32.mrb[0].mxu0
        %v2798 = vadd.f32 %v2658, %v2797
        %v2799 = vpop.f32.mrb[0].mxu0
        %v2800 = vadd.f32 %v2654, %v2799
        %v2801 = vpop.f32.mrb[0].mxu0
        %v2802 = vadd.f32 %v2658, %v2801
        %2803 = vmatprep.mubr.bf16.mxu0 0
        %2804 = vmatmul.mubr.bf16.gmra.mrb[0].mxu0 %v506
        %v2805 = vpop.f32.mrb[0].mxu0
        %v2806 = vadd.f32 %v2654, %v2805
        %v2807 = vpop.f32.mrb[0].mxu0
        %v2808 = vadd.f32 %v2658, %v2807
        %v2809 = vpop.f32.mrb[0].mxu0
        %v2810 = vadd.f32 %v2654, %v2809
        %v2811 = vpop.f32.mrb[0].mxu0
        %v2812 = vadd.f32 %v2658, %v2811
        %2813 = vmatprep.mubr.bf16.mxu0 0
        %2814 = vmatmul.mubr.bf16.gmra.mrb[0].mxu0 %v509
        %v2815 = vpop.f32.mrb[0].mxu0
        %v2816 = vadd.f32 %v2654, %v2815
        %v2817 = vpop.f32.mrb[0].mxu0
        %v2818 = vadd.f32 %v2658, %v2817
        %v2819 = vpop.f32.mrb[0].mxu0
        %v2820 = vadd.f32 %v2654, %v2819
        %v2821 = vpop.f32.mrb[0].mxu0
        %v2822 = vadd.f32 %v2658, %v2821
        %2823 = vmatprep.mubr.bf16.mxu0 0
        %2824 = vmatmul.mubr.bf16.gmra.mrb[0].mxu0 %v512
        %v2825 = vpop.f32.mrb[0].mxu0
        %v2826 = vadd.f32 %v2654, %v2825
        %v2827 = vpop.f32.mrb[0].mxu0
        %v2828 = vadd.f32 %v2658, %v2827
        %v2829 = vpop.f32.mrb[0].mxu0
        %v2830 = vadd.f32 %v2654, %v2829
        %v2831 = vpop.f32.mrb[0].mxu0
        %v2832 = vadd.f32 %v2658, %v2831
        %2833 = vmatprep.mubr.bf16.mxu0 0
        %2834 = vmatmul.mubr.bf16.gmra.mrb[0].mxu0 %v515
        %v2835 = vpop.f32.mrb[0].mxu0
        %v2836 = vadd.f32 %v2654, %v2835
        %v2837 = vpop.f32.mrb[0].mxu0
        %v2838 = vadd.f32 %v2658, %v2837
        %v2839 = vpop.f32.mrb[0].mxu0
        %v2840 = vadd.f32 %v2654, %v2839
        %v2841 = vpop.f32.mrb[0].mxu0
        %v2842 = vadd.f32 %v2658, %v2841
        %2843 = vmatprep.mubr.bf16.mxu0 0
        %2844 = vmatmul.mubr.bf16.gmra.mrb[0].mxu0 %v518
        %v2845 = vpop.f32.mrb[0].mxu0
        %v2846 = vadd.f32 %v2654, %v2845
        %v2847 = vpop.f32.mrb[0].mxu0
        %v2848 = vadd.f32 %v2658, %v2847
        %v2849 = vpop.f32.mrb[0].mxu0
        %v2850 = vadd.f32 %v2654, %v2849
        %v2851 = vpop.f32.mrb[0].mxu0
        %v2852 = vadd.f32 %v2658, %v2851
        %2853 = vmatprep.mubr.bf16.mxu0 0
        %2854 = vmatmul.mubr.bf16.gmra.mrb[0].mxu0 %v521
        %v2855 = vpop.f32.mrb[0].mxu0
        %v2856 = vadd.f32 %v2654, %v2855
        %v2857 = vpop.f32.mrb[0].mxu0
        %v2858 = vadd.f32 %v2658, %v2857
        %v2859 = vpop.f32.mrb[0].mxu0
        %v2860 = vadd.f32 %v2654, %v2859
        %v2861 = vpop.f32.mrb[0].mxu0
        %v2862 = vadd.f32 %v2658, %v2861
        %2863 = vmatprep.mubr.bf16.mxu0 0
        %2864 = vmatmul.mubr.bf16.gmra.mrb[0].mxu0 %v524
        %v2865 = vpop.f32.mrb[0].mxu0
        %v2866 = vadd.f32 %v2654, %v2865
        %v2867 = vpop.f32.mrb[0].mxu0
        %v2868 = vadd.f32 %v2658, %v2867
        %v2869 = vpop.f32.mrb[0].mxu0
        %v2870 = vadd.f32 %v2654, %v2869
        %v2871 = vpop.f32.mrb[0].mxu0
        %v2872 = vadd.f32 %v2658, %v2871
        %2873 = vmatprep.mubr.bf16.mxu0 0
        %2874 = vmatmul.mubr.bf16.gmra.mrb[0].mxu0 %v527
        %v2875 = vpop.f32.mrb[0].mxu0
        %v2876 = vadd.f32 %v2654, %v2875
        %v2877 = vpop.f32.mrb[0].mxu0
        %v2878 = vadd.f32 %v2658, %v2877
        %v2879 = vpop.f32.mrb[0].mxu0
        %v2880 = vadd.f32 %v2654, %v2879
        %v2881 = vpop.f32.mrb[0].mxu0
        %v2882 = vadd.f32 %v2658, %v2881
        %2883 = vmatprep.mubr.bf16.mxu0 0
        %2884 = vmatmul.mubr.bf16.gmra.mrb[0].mxu0 %v530
        %v2885 = vpop.f32.mrb[0].mxu0
        %v2886 = vadd.f32 %v2654, %v2885
        %v2887 = vpop.f32.mrb[0].mxu0
        %v2888 = vadd.f32 %v2658, %v2887
        %v2889 = vpop.f32.mrb[0].mxu0
        %v2890 = vadd.f32 %v2654, %v2889
        %v2891 = vpop.f32.mrb[0].mxu0
        %v2892 = vadd.f32 %v2658, %v2891
        %2893 = vdwg.mxu0
        %v2894 = vadd.f32 %v2483, %v2736
        %v2895 = vadd.f32 %v2485, %v2738
        %v2896 = vadd.f32 %v2487, %v2740
        %v2897 = vadd.f32 %v2489, %v2742
        %v2898 = vadd.f32 %v2493, %v2746
        %v2899 = vadd.f32 %v2495, %v2748
        %v2900 = vadd.f32 %v2497, %v2750
        %v2901 = vadd.f32 %v2499, %v2752
        %v2902 = vadd.f32 %v2503, %v2756
        %v2903 = vadd.f32 %v2505, %v2758
        %v2904 = vadd.f32 %v2507, %v2760
        %v2905 = vadd.f32 %v2509, %v2762
        %v2906 = vadd.f32 %v2513, %v2766
        %v2907 = vadd.f32 %v2515, %v2768
        %v2908 = vadd.f32 %v2517, %v2770
        %v2909 = vadd.f32 %v2519, %v2772
        %v2910 = vadd.f32 %v2523, %v2776
        %v2911 = vadd.f32 %v2525, %v2778
        %v2912 = vadd.f32 %v2527, %v2780
        %v2913 = vadd.f32 %v2529, %v2782
        %v2914 = vadd.f32 %v2533, %v2786
        %v2915 = vadd.f32 %v2535, %v2788
        %v2916 = vadd.f32 %v2537, %v2790
        %v2917 = vadd.f32 %v2539, %v2792
        %v2918 = vadd.f32 %v2543, %v2796
        %v2919 = vadd.f32 %v2545, %v2798
        %v2920 = vadd.f32 %v2547, %v2800
        %v2921 = vadd.f32 %v2549, %v2802
        %v2922 = vadd.f32 %v2553, %v2806
        %v2923 = vadd.f32 %v2555, %v2808
        %v2924 = vadd.f32 %v2557, %v2810
        %v2925 = vadd.f32 %v2559, %v2812
        %v2926 = vadd.f32 %v2563, %v2816
        %v2927 = vadd.f32 %v2565, %v2818
        %v2928 = vadd.f32 %v2567, %v2820
        %v2929 = vadd.f32 %v2569, %v2822
        %v2930 = vadd.f32 %v2573, %v2826
        %v2931 = vadd.f32 %v2575, %v2828
        %v2932 = vadd.f32 %v2577, %v2830
        %v2933 = vadd.f32 %v2579, %v2832
        %v2934 = vadd.f32 %v2583, %v2836
        %v2935 = vadd.f32 %v2585, %v2838
        %v2936 = vadd.f32 %v2587, %v2840
        %v2937 = vadd.f32 %v2589, %v2842
        %v2938 = vadd.f32 %v2593, %v2846
        %v2939 = vadd.f32 %v2595, %v2848
        %v2940 = vadd.f32 %v2597, %v2850
        %v2941 = vadd.f32 %v2599, %v2852
        %v2942 = vadd.f32 %v2603, %v2856
        %v2943 = vadd.f32 %v2605, %v2858
        %v2944 = vadd.f32 %v2607, %v2860
        %v2945 = vadd.f32 %v2609, %v2862
        %v2946 = vadd.f32 %v2613, %v2866
        %v2947 = vadd.f32 %v2615, %v2868
        %v2948 = vadd.f32 %v2617, %v2870
        %v2949 = vadd.f32 %v2619, %v2872
        %v2950 = vadd.f32 %v2623, %v2876
        %v2951 = vadd.f32 %v2625, %v2878
        %v2952 = vadd.f32 %v2627, %v2880
        %v2953 = vadd.f32 %v2629, %v2882
        %v2954 = vadd.f32 %v2633, %v2886
        %v2955 = vadd.f32 %v2635, %v2888
        %v2956 = vadd.f32 %v2637, %v2890
        %v2957 = vadd.f32 %v2639, %v2892
        %v2958 = vmax.f32 %v2894, 0.0
        %v2959 = vmax.f32 %v2895, 0.0
        %v2960 = vmax.f32 %v2896, 0.0
        %v2961 = vmax.f32 %v2897, 0.0
        %v2962 = vmax.f32 %v2898, 0.0
        %v2963 = vmax.f32 %v2899, 0.0
        %v2964 = vmax.f32 %v2900, 0.0
        %v2965 = vmax.f32 %v2901, 0.0
        %v2966 = vmax.f32 %v2902, 0.0
        %v2967 = vmax.f32 %v2903, 0.0
        %v2968 = vmax.f32 %v2904, 0.0
        %v2969 = vmax.f32 %v2905, 0.0
        %v2970 = vmax.f32 %v2906, 0.0
        %v2971 = vmax.f32 %v2907, 0.0
        %v2972 = vmax.f32 %v2908, 0.0
        %v2973 = vmax.f32 %v2909, 0.0
        %v2974 = vmax.f32 %v2910, 0.0
        %v2975 = vmax.f32 %v2911, 0.0
        %v2976 = vmax.f32 %v2912, 0.0
        %v2977 = vmax.f32 %v2913, 0.0
        %v2978 = vmax.f32 %v2914, 0.0
        %v2979 = vmax.f32 %v2915, 0.0
        %v2980 = vmax.f32 %v2916, 0.0
        %v2981 = vmax.f32 %v2917, 0.0
        %v2982 = vmax.f32 %v2918, 0.0
        %v2983 = vmax.f32 %v2919, 0.0
        %v2984 = vmax.f32 %v2920, 0.0
        %v2985 = vmax.f32 %v2921, 0.0
        %v2986 = vmax.f32 %v2922, 0.0
        %v2987 = vmax.f32 %v2923, 0.0
        %v2988 = vmax.f32 %v2924, 0.0
        %v2989 = vmax.f32 %v2925, 0.0
        %v2990 = vmax.f32 %v2926, 0.0
        %v2991 = vmax.f32 %v2927, 0.0
        %v2992 = vmax.f32 %v2928, 0.0
        %v2993 = vmax.f32 %v2929, 0.0
        %v2994 = vmax.f32 %v2930, 0.0
        %v2995 = vmax.f32 %v2931, 0.0
        %v2996 = vmax.f32 %v2932, 0.0
        %v2997 = vmax.f32 %v2933, 0.0
        %v2998 = vmax.f32 %v2934, 0.0
        %v2999 = vmax.f32 %v2935, 0.0
        %v3000 = vmax.f32 %v2936, 0.0
        %v3001 = vmax.f32 %v2937, 0.0
        %v3002 = vmax.f32 %v2938, 0.0
        %v3003 = vmax.f32 %v2939, 0.0
        %v3004 = vmax.f32 %v2940, 0.0
        %v3005 = vmax.f32 %v2941, 0.0
        %v3006 = vmax.f32 %v2942, 0.0
        %v3007 = vmax.f32 %v2943, 0.0
        %v3008 = vmax.f32 %v2944, 0.0
        %v3009 = vmax.f32 %v2945, 0.0
        %v3010 = vmax.f32 %v2946, 0.0
        %v3011 = vmax.f32 %v2947, 0.0
        %v3012 = vmax.f32 %v2948, 0.0
        %v3013 = vmax.f32 %v2949, 0.0
        %v3014 = vmax.f32 %v2950, 0.0
        %v3015 = vmax.f32 %v2951, 0.0
        %v3016 = vmax.f32 %v2952, 0.0
        %v3017 = vmax.f32 %v2953, 0.0
        %v3018 = vmax.f32 %v2954, 0.0
        %v3019 = vmax.f32 %v2955, 0.0
        %v3020 = vmax.f32 %v2956, 0.0
        %v3021 = vmax.f32 %v2957, 0.0
        %3022 = vst [vmem:[%s325] sm:$0xff] %v2958
        %3023 = vst [vmem:[%s325 + $0x8] sm:$0xff] %v2959
        %3024 = vst [vmem:[%s325 + $0x10] sm:$0xff] %v2960
        %3025 = vst [vmem:[%s325 + $0x18] sm:$0xff] %v2961
        %3026 = vst [vmem:[%s325 + $0x20] sm:$0xff] %v2962
        %3027 = vst [vmem:[%s325 + $0x28] sm:$0xff] %v2963
        %3028 = vst [vmem:[%s325 + $0x30] sm:$0xff] %v2964
        %3029 = vst [vmem:[%s325 + $0x38] sm:$0xff] %v2965
        %3030 = vst [vmem:[%s325 + $0x40] sm:$0xff] %v2966
        %3031 = vst [vmem:[%s325 + $0x48] sm:$0xff] %v2967
        %3032 = vst [vmem:[%s325 + $0x50] sm:$0xff] %v2968
        %3033 = vst [vmem:[%s325 + $0x58] sm:$0xff] %v2969
        %3034 = vst [vmem:[%s325 + $0x60] sm:$0xff] %v2970
        %3035 = vst [vmem:[%s325 + $0x68] sm:$0xff] %v2971
        %3036 = vst [vmem:[%s325 + $0x70] sm:$0xff] %v2972
        %3037 = vst [vmem:[%s325 + $0x78] sm:$0xff] %v2973
        %3038 = vst [vmem:[%s325 + $0x80] sm:$0xff] %v2974
        %3039 = vst [vmem:[%s325 + $0x88] sm:$0xff] %v2975
        %3040 = vst [vmem:[%s325 + $0x90] sm:$0xff] %v2976
        %3041 = vst [vmem:[%s325 + $0x98] sm:$0xff] %v2977
        %3042 = vst [vmem:[%s325 + $0xa0] sm:$0xff] %v2978
        %3043 = vst [vmem:[%s325 + $0xa8] sm:$0xff] %v2979
        %3044 = vst [vmem:[%s325 + $0xb0] sm:$0xff] %v2980
        %3045 = vst [vmem:[%s325 + $0xb8] sm:$0xff] %v2981
        %3046 = vst [vmem:[%s325 + $0xc0] sm:$0xff] %v2982
        %3047 = vst [vmem:[%s325 + $0xc8] sm:$0xff] %v2983
        %3048 = vst [vmem:[%s325 + $0xd0] sm:$0xff] %v2984
        %3049 = vst [vmem:[%s325 + $0xd8] sm:$0xff] %v2985
        %3050 = vst [vmem:[%s325 + $0xe0] sm:$0xff] %v2986
        %3051 = vst [vmem:[%s325 + $0xe8] sm:$0xff] %v2987
        %3052 = vst [vmem:[%s325 + $0xf0] sm:$0xff] %v2988
        %3053 = vst [vmem:[%s325 + $0xf8] sm:$0xff] %v2989
        %3054 = vst [vmem:[%s325 + $0x100] sm:$0xff] %v2990
        %3055 = vst [vmem:[%s325 + $0x108] sm:$0xff] %v2991
        %3056 = vst [vmem:[%s325 + $0x110] sm:$0xff] %v2992
        %3057 = vst [vmem:[%s325 + $0x118] sm:$0xff] %v2993
        %3058 = vst [vmem:[%s325 + $0x120] sm:$0xff] %v2994
        %3059 = vst [vmem:[%s325 + $0x128] sm:$0xff] %v2995
        %3060 = vst [vmem:[%s325 + $0x130] sm:$0xff] %v2996
        %3061 = vst [vmem:[%s325 + $0x138] sm:$0xff] %v2997
        %3062 = vst [vmem:[%s325 + $0x140] sm:$0xff] %v2998
        %3063 = vst [vmem:[%s325 + $0x148] sm:$0xff] %v2999
        %3064 = vst [vmem:[%s325 + $0x150] sm:$0xff] %v3000
        %3065 = vst [vmem:[%s325 + $0x158] sm:$0xff] %v3001
        %3066 = vst [vmem:[%s325 + $0x160] sm:$0xff] %v3002
        %3067 = vst [vmem:[%s325 + $0x168] sm:$0xff] %v3003
        %3068 = vst [vmem:[%s325 + $0x170] sm:$0xff] %v3004
        %3069 = vst [vmem:[%s325 + $0x178] sm:$0xff] %v3005
        %3070 = vst [vmem:[%s325 + $0x180] sm:$0xff] %v3006
        %3071 = vst [vmem:[%s325 + $0x188] sm:$0xff] %v3007
        %3072 = vst [vmem:[%s325 + $0x190] sm:$0xff] %v3008
        %3073 = vst [vmem:[%s325 + $0x198] sm:$0xff] %v3009
        %3074 = vst [vmem:[%s325 + $0x1a0] sm:$0xff] %v3010
        %3075 = vst [vmem:[%s325 + $0x1a8] sm:$0xff] %v3011
        %3076 = vst [vmem:[%s325 + $0x1b0] sm:$0xff] %v3012
        %3077 = vst [vmem:[%s325 + $0x1b8] sm:$0xff] %v3013
        %3078 = vst [vmem:[%s325 + $0x1c0] sm:$0xff] %v3014
        %3079 = vst [vmem:[%s325 + $0x1c8] sm:$0xff] %v3015
        %3080 = vst [vmem:[%s325 + $0x1d0] sm:$0xff] %v3016
        %3081 = vst [vmem:[%s325 + $0x1d8] sm:$0xff] %v3017
        %3082 = vst [vmem:[%s325 + $0x1e0] sm:$0xff] %v3018
        %3083 = vst [vmem:[%s325 + $0x1e8] sm:$0xff] %v3019
        %3084 = vst [vmem:[%s325 + $0x1f0] sm:$0xff] %v3020
        %3085 = vst [vmem:[%s325 + $0x1f8] sm:$0xff] %v3021
        %s3086 = sand.u32 %s225, 1
        %s3087 = scalar_lea.sflag [#allocation3], %s3086
        %s3088 = sand.u32 %s225, 1
        %s3089 = smul.addr %s3088, 512
        %s3090 = scalar_lea.vmem [#allocation2], %s3089
        // Predicated region
        $region57: #{bottleneck_forward.1} parent=55 // pred_check
          %p3091 = pneg %p235
        $region58: #{bottleneck_forward.1} parent=55 // pred_check_branch
          %3093 = sbr.rel (%p3091) target = $region60
        $region59: #{bottleneck_forward.1} parent=55 // pred_region
          %s3095 = ssub.s32 8192, 8192
          %3096 = vsyncadd %s3087, %s3095
          %s3097 = smul.addr %s23, 64
          %s3098 = smul.addr %s3097, 128
          %s3099 = scalar_lea.hbm %s9, %s3098
          %s3100 = sshll.u32 %s3090, 4
          %s3101 = int_to_ptr.vmem [resolvable:$true] %s3100
          %3106 = dma.vmem_to_hbm [thread:$0]  %s3101, 8192, %s3099, %s3087, 256, 256, 16
        $region60: #{bottleneck_forward.1} parent=55 // pred_fallthru
          _
      $region56: #{bottleneck_forward.1} parent=5 // pred_fallthru
        _
      %p3107 = scmp.le.s32.totalorder 2, %s18
      // Predicated region
      $region61: #{bottleneck_forward.1} parent=5 // pred_check
        %p3108 = pneg %p3107
      $region62: #{bottleneck_forward.1} parent=5 // pred_check_branch
        %3110 = sbr.rel (%p3108) target = $region64
      $region63: #{bottleneck_forward.1} parent=5 // pred_region
        %s3111 = ssub.s32 %s18, 2
        // Predicated region
        $region65: #{bottleneck_forward.1} parent=63 // pred_check
          %p3112 = pneg %p241
        $region66: #{bottleneck_forward.1} parent=63 // pred_check_branch
          %3114 = sbr.rel (%p3112) target = $region68
        $region67: #{bottleneck_forward.1} parent=63 // pred_region
          %s3115 = sand.u32 %s226, 1
          %s3116 = scalar_lea.sflag [#allocation3], %s3115
          %s3117 = sand.u32 %s226, 1
          %s3118 = smul.addr %s3117, 512
          %s3119 = scalar_lea.vmem [#allocation2], %s3118
          %3120 = dma.done %s3116, 8192
        $region68: #{bottleneck_forward.1} parent=63 // pred_fallthru
          _
      $region64: #{bottleneck_forward.1} parent=5 // pred_fallthru
        _
    $region6: #{bottleneck_forward.1} parent=1 // loop_footer
      %s22 = sadd.s32 1, %s18
    $region7: #{bottleneck_forward.1} parent=1 // loop_footer_branch
      %17 = sbr.rel target = $region3
    $region8: #{bottleneck_forward.1} parent=1 // loop_exit
      _
    %3121 = vsyncpa [#allocation3], 1
    %s3122 = scalar_lea.sflag [#allocation3], 1
    %3123 = vsyncpa %s3122, 1

</llo_original>
